<compile_context>
chip_gen: v6e
topology: v6e:2x2x1
jax: 0.10.0
libtpu: 0.0.40
codegen_flags: <defaults>
</compile_context>

<pallas_src>
import functools

import jax
import jax.numpy as jnp
from jax import lax
from jax.experimental import pallas as pl
from jax.experimental.pallas import tpu as pltpu


# --------------------------- fused LSTM + FC kernel ---------------------------

def _fused_lstm_fc_kernel(*refs, T, Bp, H, num_layers, compute_dtype):
    # ref layout:
    #   refs[0]                       x2d   (T*Bp, D)  compute_dtype
    #   per layer l: wih (Din,4H) cd, whh (H,4H) cd, bias (1,4H) f32
    #   wfc (H, O) cd, bfc (1, O) f32
    #   out (Bp, O) f32
    #   scratch: gates (T*Bp,4H) f32, hseq (T*Bp,H) compute_dtype
    x_ref = refs[0]
    pos = 1
    layer_refs = []
    for _ in range(num_layers):
        layer_refs.append(tuple(refs[pos:pos + 3]))
        pos += 3
    wfc_ref, bfc_ref = refs[pos], refs[pos + 1]
    out_ref = refs[pos + 2]
    gates_sc, hseq_sc = refs[pos + 3], refs[pos + 4]

    h_last = None
    for layer_idx, (wih_ref, whh_ref, b_ref) in enumerate(layer_refs):
        # ---- hoisted input projection: one big MXU matmul for all timesteps ----
        if layer_idx == 0:
            src = x_ref[...]              # already compute_dtype
        else:
            src = hseq_sc[...]            # prev layer's hidden seq, already bf16
        gates_sc[...] = (
            jnp.dot(src, wih_ref[...], preferred_element_type=jnp.float32)
            + b_ref[...]
        )

        whh = whh_ref[...]                    # hoist weight load out of the time loop
        write_seq = (layer_idx + 1 < num_layers)   # last layer: only h[T-1] consumed

        def step(t, carry):
            h_prev, c_prev = carry            # (Bp,H) compute_dtype, (Bp,H) f32
            row = pl.multiple_of(t * Bp, Bp)  # Bp multiple of 16 -> aligned slices
            # Recurrent part only: (Bp,H) x (H,4H) matmul + elementwise cell math.
            g = gates_sc[pl.ds(row, Bp), :] + jnp.dot(
                h_prev, whh, preferred_element_type=jnp.float32)
            # gate order was pre-permuted to (i, f, o, g):
            sig = jax.nn.sigmoid(g[:, :3 * H])        # contiguous sigmoid block
            g_gate = jnp.tanh(g[:, 3 * H:])           # contiguous tanh block
            i_g = sig[:, 0 * H:1 * H]
            f_g = sig[:, 1 * H:2 * H]
            o_g = sig[:, 2 * H:3 * H]
            c_new = f_g * c_prev + i_g * g_gate                       # f32
            h_new = (o_g * jnp.tanh(c_new)).astype(compute_dtype)     # fused downcast
            if write_seq:
                hseq_sc[pl.ds(row, Bp), :] = h_new                    # bf16 store
            return (h_new, c_new)

        init = (jnp.zeros((Bp, H), compute_dtype),
                jnp.zeros((Bp, H), jnp.float32))
        # Full unroll only for short sequences; cap at 8 otherwise.
        h_last, _ = lax.fori_loop(0, T, step, init,
                                  unroll=(True if T <= 8 else 8))

    # ---- fused final Linear on the last timestep's hidden state (bf16 MXU) ----
    out_ref[...] = (
        jnp.dot(h_last, wfc_ref[...], preferred_element_type=jnp.float32)
        + bfc_ref[...]
    ).astype(out_ref.dtype)


# --------------------------------- wrapper ------------------------------------

@jax.jit
def my_lstm_forward(x_btd, layer_params, w_fc_t, b_fc_row):
    """x_btd: (B, T, input_size)  (batch_first, like the PyTorch module).

    layer_params: tuple of (w_ih_t (Din,4H) bf16, w_hh_t (H,4H) bf16, bias (1,4H) f32)
                  with gate columns pre-ordered (i, f, o, g).
    w_fc_t: (H, O) bf16,  b_fc_row: (1, O) f32.
    Returns (B, O) f32.
    """
    B, T, D = x_btd.shape
    H = layer_params[0][1].shape[0]
    L = len(layer_params)
    O = w_fc_t.shape[1]
    compute_dtype = layer_params[0][0].dtype

    # Sublane alignment: 16 rows for 16-bit compute dtypes (packed sublanes),
    # 8 for 32-bit. Keeps all per-timestep dynamic row offsets tile-aligned.
    sub = 8 if jnp.dtype(compute_dtype).itemsize >= 4 else 16
    Bp = max(sub, ((B + sub - 1) // sub) * sub)

    x_tbd = jnp.transpose(x_btd, (1, 0, 2))             # (T, B, D) time-major
    if Bp != B:
        x_tbd = jnp.pad(x_tbd, ((0, 0), (0, Bp - B), (0, 0)))
    x2d = x_tbd.reshape(T * Bp, D).astype(compute_dtype)

    flat_params = []
    for (wih_t, whh_t, bias) in layer_params:
        flat_params += [wih_t, whh_t, bias]

    kernel = functools.partial(
        _fused_lstm_fc_kernel,
        T=T, Bp=Bp, H=H, num_layers=L, compute_dtype=compute_dtype)

    out = pl.pallas_call(
        kernel,
        out_shape=jax.ShapeDtypeStruct((Bp, O), jnp.float32),
        scratch_shapes=[
            pltpu.VMEM((T * Bp, 4 * H), jnp.float32),   # gate pre-activations
            pltpu.VMEM((T * Bp, H), compute_dtype),     # inter-layer hidden seq (bf16)
        ],
    )(x2d, *flat_params, w_fc_t, b_fc_row)
    return out[:B]


# --------------------------- parameter preparation ----------------------------

def _reorder_ifgo_to_ifog(w):
    """Permute torch gate order (i,f,g,o) -> (i,f,o,g) along axis 0."""
    H = w.shape[0] // 4
    return jnp.concatenate([w[:2 * H], w[3 * H:], w[2 * H:3 * H]], axis=0)


def prepare_layer_params(torch_layers, compute_dtype=jnp.bfloat16):
    """torch_layers: list of (w_ih (4H,Din), w_hh (4H,H), b_ih (4H,), b_hh (4H,))."""
    prepped = []
    for (w_ih, w_hh, b_ih, b_hh) in torch_layers:
        H4 = w_ih.shape[0]
        wih_t = _reorder_ifgo_to_ifog(w_ih).T.astype(compute_dtype)
        whh_t = _reorder_ifgo_to_ifog(w_hh).T.astype(compute_dtype)
        bias = _reorder_ifgo_to_ifog(b_ih + b_hh).reshape(1, H4).astype(jnp.float32)
        prepped.append((wih_t, whh_t, bias))
    return tuple(prepped)


# ------------------------------ pure-JAX reference ----------------------------

def reference_forward(x_btd, torch_layers, w_fc_t_f32, b_fc_row, H,
                      compute_dtype=jnp.bfloat16):
    """Matches torch.nn.LSTM semantics; uses the same bf16-in / f32-accum matmul
    precision as the kernel so results are directly comparable."""
    seq = jnp.transpose(x_btd, (1, 0, 2))  # (T, B, D)
    B = x_btd.shape[0]
    for (w_ih, w_hh, b_ih, b_hh) in torch_layers:
        wih_t = w_ih.T.astype(compute_dtype)
        whh_t = w_hh.T.astype(compute_dtype)
        bias = (b_ih + b_hh).astype(jnp.float32)

        def step(carry, xt):
            hh, cc = carry
            gates = (
                jnp.dot(xt.astype(compute_dtype), wih_t,
                        preferred_element_type=jnp.float32)
                + jnp.dot(hh.astype(compute_dtype), whh_t,
                          preferred_element_type=jnp.float32)
                + bias)
            i = jax.nn.sigmoid(gates[:, :H])
            f = jax.nn.sigmoid(gates[:, H:2 * H])
            g = jnp.tanh(gates[:, 2 * H:3 * H])
            o = jax.nn.sigmoid(gates[:, 3 * H:])
            cc = f * cc + i * g
            hh = o * jnp.tanh(cc)
            return (hh, cc), hh

        init = (jnp.zeros((B, H), jnp.float32), jnp.zeros((B, H), jnp.float32))
        _, seq = lax.scan(step, init, seq)
    # Final linear at the kernel's precision: bf16 x bf16 -> f32 accum + f32 bias.
    return (jnp.dot(seq[-1].astype(compute_dtype),
                    w_fc_t_f32.astype(compute_dtype),
                    preferred_element_type=jnp.float32) + b_fc_row)


# ----------------------------------- main --------------------------------------

if __name__ == "__main__":
    B, T = 2, 8
    INPUT_SIZE = 16
    HIDDEN = 32
    NUM_LAYERS = 2
    OUTPUT_SIZE = 10
    COMPUTE_DTYPE = jnp.bfloat16

    key = jax.random.PRNGKey(0)
    k_x, k_p = jax.random.split(key)
    x = jax.random.normal(k_x, (B, T, INPUT_SIZE), dtype=jnp.float32)

    # Deterministic init matching torch.nn.LSTM / Linear shapes,
    # uniform(-1/sqrt(H), 1/sqrt(H)), gate order (i,f,g,o).
    bound = 1.0 / jnp.sqrt(jnp.float32(HIDDEN))
    keys = jax.random.split(k_p, NUM_LAYERS * 4 + 2)
    torch_layers = []
    for layer in range(NUM_LAYERS):
        d_in = INPUT_SIZE if layer == 0 else HIDDEN
        kw1, kw2, kb1, kb2 = keys[4 * layer:4 * layer + 4]
        w_ih = jax.random.uniform(kw1, (4 * HIDDEN, d_in), jnp.float32, -bound, bound)
        w_hh = jax.random.uniform(kw2, (4 * HIDDEN, HIDDEN), jnp.float32, -bound, bound)
        b_ih = jax.random.uniform(kb1, (4 * HIDDEN,), jnp.float32, -bound, bound)
        b_hh = jax.random.uniform(kb2, (4 * HIDDEN,), jnp.float32, -bound, bound)
        torch_layers.append((w_ih, w_hh, b_ih, b_hh))

    kwf, kbf = keys[-2], keys[-1]
    w_fc = jax.random.uniform(kwf, (OUTPUT_SIZE, HIDDEN), jnp.float32, -bound, bound)
    b_fc = jax.random.uniform(kbf, (OUTPUT_SIZE,), jnp.float32, -bound, bound)
    w_fc_t_f32 = w_fc.T
    w_fc_t = w_fc_t_f32.astype(COMPUTE_DTYPE)           # bf16 MXU path in the kernel
    b_fc_row = b_fc.reshape(1, OUTPUT_SIZE)

    layer_params = prepare_layer_params(torch_layers, COMPUTE_DTYPE)

    out = my_lstm_forward(x, layer_params, w_fc_t, b_fc_row)
    out = jax.block_until_ready(out)

    ref = reference_forward(x, torch_layers, w_fc_t_f32, b_fc_row, HIDDEN,
                            COMPUTE_DTYPE)
    assert out.shape == (B, OUTPUT_SIZE)
    assert jnp.allclose(out, ref, atol=2e-3, rtol=2e-3), (
        f"max abs diff {float(jnp.max(jnp.abs(out - ref)))}")

    print("KERNEL_OK")
</pallas_src>

<mosaic_0001>
module attributes {stable_mosaic.version = 11 : i64} {
  func.func @_fused_lstm_fc_kernel(%arg0: memref<128x16xbf16, #tpu.memory_space<vmem>>, %arg1: memref<16x128xbf16, #tpu.memory_space<vmem>>, %arg2: memref<32x128xbf16, #tpu.memory_space<vmem>>, %arg3: memref<1x128xf32, #tpu.memory_space<vmem>>, %arg4: memref<32x128xbf16, #tpu.memory_space<vmem>>, %arg5: memref<32x128xbf16, #tpu.memory_space<vmem>>, %arg6: memref<1x128xf32, #tpu.memory_space<vmem>>, %arg7: memref<32x10xbf16, #tpu.memory_space<vmem>>, %arg8: memref<1x10xf32, #tpu.memory_space<vmem>>, %arg9: memref<16x10xf32, #tpu.memory_space<vmem>>, %arg10: memref<128x128xf32, #tpu.memory_space<vmem>>, %arg11: memref<128x32xbf16, #tpu.memory_space<vmem>>) attributes {dimension_semantics = [], scalar_prefetch = 0 : i64, scratch_operands = 2 : i64, tpu.core_type = #tpu.core_type<tc>} {
    %c0 = arith.constant 0 : index
    %c0_0 = arith.constant 0 : index
    %0 = vector.load %arg0[%c0, %c0_0] : memref<128x16xbf16, #tpu.memory_space<vmem>>, vector<128x16xbf16>
    %c0_1 = arith.constant 0 : index
    %c0_2 = arith.constant 0 : index
    %1 = vector.load %arg1[%c0_1, %c0_2] : memref<16x128xbf16, #tpu.memory_space<vmem>>, vector<16x128xbf16>
    %cst = arith.constant dense<0.000000e+00> : vector<128x128xf32>
    %2 = tpu.matmul %0, %1, %cst {dimension_numbers = #tpu.dot_dimension_numbers<[1], [0], [0], [1], [0, 0, 1, 1], [], []>} : vector<128x16xbf16>, vector<16x128xbf16>, vector<128x128xf32> -> vector<128x128xf32>
    %c0_3 = arith.constant 0 : index
    %c0_4 = arith.constant 0 : index
    %3 = vector.load %arg3[%c0_3, %c0_4] : memref<1x128xf32, #tpu.memory_space<vmem>>, vector<1x128xf32>
    %4 = vector.broadcast %3 : vector<1x128xf32> to vector<128x128xf32>
    %5 = arith.addf %2, %4 : vector<128x128xf32>
    %c0_5 = arith.constant 0 : index
    %c0_6 = arith.constant 0 : index
    %6 = vector.load %arg10[%c0_5, %c0_6] : memref<128x128xf32, #tpu.memory_space<vmem>>, vector<128x128xf32>
    tpu.vector_store %arg10[%c0_5, %c0_6], %5 {strides = array<i32>} : memref<128x128xf32, #tpu.memory_space<vmem>>, vector<128x128xf32>,
    %c0_7 = arith.constant 0 : index
    %c0_8 = arith.constant 0 : index
    %7 = vector.load %arg2[%c0_7, %c0_8] : memref<32x128xbf16, #tpu.memory_space<vmem>>, vector<32x128xbf16>
    %cst_9 = arith.constant 0.000000e+00 : bf16
    %8 = vector.broadcast %cst_9 : bf16 to vector<16x32xbf16>
    %cst_10 = arith.constant 0.000000e+00 : f32
    %9 = vector.broadcast %cst_10 : f32 to vector<16x32xf32>
    %c0_i32 = arith.constant 0 : i32
    %c16_i32 = arith.constant 16 : i32
    %10 = arith.muli %c0_i32, %c16_i32 : i32
    %11 = tpu.assume_multiple %10, 16 : i32
    %12 = arith.index_cast %11 : i32 to index
    %c0_11 = arith.constant 0 : index
    %13 = vector.load %arg10[%12, %c0_11] : memref<128x128xf32, #tpu.memory_space<vmem>>, vector<16x128xf32>
    %cst_12 = arith.constant dense<0.000000e+00> : vector<16x128xf32>
    %14 = tpu.matmul %8, %7, %cst_12 {dimension_numbers = #tpu.dot_dimension_numbers<[1], [0], [0], [1], [0, 0, 1, 1], [], []>} : vector<16x32xbf16>, vector<32x128xbf16>, vector<16x128xf32> -> vector<16x128xf32>
    %15 = arith.addf %13, %14 : vector<16x128xf32>
    %16 = vector.extract_strided_slice %15 {offsets = [0, 0], sizes = [16, 96], strides = [1, 1]} : vector<16x128xf32> to vector<16x96xf32>
    %17 = arith.negf %16 : vector<16x96xf32>
    %18 = math.exp %17 : vector<16x96xf32>
    %cst_13 = arith.constant 1.000000e+00 : f32
    %19 = vector.broadcast %cst_13 : f32 to vector<16x96xf32>
    %20 = arith.addf %19, %18 : vector<16x96xf32>
    %21 = arith.divf %19, %20 : vector<16x96xf32>
    %22 = vector.extract_strided_slice %15 {offsets = [0, 96], sizes = [16, 32], strides = [1, 1]} : vector<16x128xf32> to vector<16x32xf32>
    %23 = math.tanh %22 : vector<16x32xf32>
    %24 = vector.extract_strided_slice %21 {offsets = [0, 0], sizes = [16, 32], strides = [1, 1]} : vector<16x96xf32> to vector<16x32xf32>
    %25 = vector.extract_strided_slice %21 {offsets = [0, 32], sizes = [16, 32], strides = [1, 1]} : vector<16x96xf32> to vector<16x32xf32>
    %26 = vector.extract_strided_slice %21 {offsets = [0, 64], sizes = [16, 32], strides = [1, 1]} : vector<16x96xf32> to vector<16x32xf32>
    %27 = arith.mulf %25, %9 : vector<16x32xf32>
    %28 = arith.mulf %24, %23 : vector<16x32xf32>
    %29 = arith.addf %27, %28 : vector<16x32xf32>
    %30 = math.tanh %29 : vector<16x32xf32>
    %31 = arith.mulf %26, %30 : vector<16x32xf32>
    %32 = arith.truncf %31 : vector<16x32xf32> to vector<16x32xbf16>
    %33 = arith.index_cast %11 : i32 to index
    %c0_14 = arith.constant 0 : index
    %34 = vector.load %arg11[%33, %c0_14] : memref<128x32xbf16, #tpu.memory_space<vmem>>, vector<16x32xbf16>
    tpu.vector_store %arg11[%33, %c0_14], %32 {strides = array<i32>} : memref<128x32xbf16, #tpu.memory_space<vmem>>, vector<16x32xbf16>,
    %c1_i32 = arith.constant 1 : i32
    %c16_i32_15 = arith.constant 16 : i32
    %35 = arith.muli %c1_i32, %c16_i32_15 : i32
    %36 = tpu.assume_multiple %35, 16 : i32
    %37 = arith.index_cast %36 : i32 to index
    %c0_16 = arith.constant 0 : index
    %38 = vector.load %arg10[%37, %c0_16] : memref<128x128xf32, #tpu.memory_space<vmem>>, vector<16x128xf32>
    %cst_17 = arith.constant dense<0.000000e+00> : vector<16x128xf32>
    %39 = tpu.matmul %32, %7, %cst_17 {dimension_numbers = #tpu.dot_dimension_numbers<[1], [0], [0], [1], [0, 0, 1, 1], [], []>} : vector<16x32xbf16>, vector<32x128xbf16>, vector<16x128xf32> -> vector<16x128xf32>
    %40 = arith.addf %38, %39 : vector<16x128xf32>
    %41 = vector.extract_strided_slice %40 {offsets = [0, 0], sizes = [16, 96], strides = [1, 1]} : vector<16x128xf32> to vector<16x96xf32>
    %42 = arith.negf %41 : vector<16x96xf32>
    %43 = math.exp %42 : vector<16x96xf32>
    %cst_18 = arith.constant 1.000000e+00 : f32
    %44 = vector.broadcast %cst_18 : f32 to vector<16x96xf32>
    %45 = arith.addf %44, %43 : vector<16x96xf32>
    %46 = arith.divf %44, %45 : vector<16x96xf32>
    %47 = vector.extract_strided_slice %40 {offsets = [0, 96], sizes = [16, 32], strides = [1, 1]} : vector<16x128xf32> to vector<16x32xf32>
    %48 = math.tanh %47 : vector<16x32xf32>
    %49 = vector.extract_strided_slice %46 {offsets = [0, 0], sizes = [16, 32], strides = [1, 1]} : vector<16x96xf32> to vector<16x32xf32>
    %50 = vector.extract_strided_slice %46 {offsets = [0, 32], sizes = [16, 32], strides = [1, 1]} : vector<16x96xf32> to vector<16x32xf32>
    %51 = vector.extract_strided_slice %46 {offsets = [0, 64], sizes = [16, 32], strides = [1, 1]} : vector<16x96xf32> to vector<16x32xf32>
    %52 = arith.mulf %50, %29 : vector<16x32xf32>
    %53 = arith.mulf %49, %48 : vector<16x32xf32>
    %54 = arith.addf %52, %53 : vector<16x32xf32>
    %55 = math.tanh %54 : vector<16x32xf32>
    %56 = arith.mulf %51, %55 : vector<16x32xf32>
    %57 = arith.truncf %56 : vector<16x32xf32> to vector<16x32xbf16>
    %58 = arith.index_cast %36 : i32 to index
    %c0_19 = arith.constant 0 : index
    %59 = vector.load %arg11[%58, %c0_19] : memref<128x32xbf16, #tpu.memory_space<vmem>>, vector<16x32xbf16>
    tpu.vector_store %arg11[%58, %c0_19], %57 {strides = array<i32>} : memref<128x32xbf16, #tpu.memory_space<vmem>>, vector<16x32xbf16>,
    %c2_i32 = arith.constant 2 : i32
    %c16_i32_20 = arith.constant 16 : i32
    %60 = arith.muli %c2_i32, %c16_i32_20 : i32
    %61 = tpu.assume_multiple %60, 16 : i32
    %62 = arith.index_cast %61 : i32 to index
    %c0_21 = arith.constant 0 : index
    %63 = vector.load %arg10[%62, %c0_21] : memref<128x128xf32, #tpu.memory_space<vmem>>, vector<16x128xf32>
    %cst_22 = arith.constant dense<0.000000e+00> : vector<16x128xf32>
    %64 = tpu.matmul %57, %7, %cst_22 {dimension_numbers = #tpu.dot_dimension_numbers<[1], [0], [0], [1], [0, 0, 1, 1], [], []>} : vector<16x32xbf16>, vector<32x128xbf16>, vector<16x128xf32> -> vector<16x128xf32>
    %65 = arith.addf %63, %64 : vector<16x128xf32>
    %66 = vector.extract_strided_slice %65 {offsets = [0, 0], sizes = [16, 96], strides = [1, 1]} : vector<16x128xf32> to vector<16x96xf32>
    %67 = arith.negf %66 : vector<16x96xf32>
    %68 = math.exp %67 : vector<16x96xf32>
    %cst_23 = arith.constant 1.000000e+00 : f32
    %69 = vector.broadcast %cst_23 : f32 to vector<16x96xf32>
    %70 = arith.addf %69, %68 : vector<16x96xf32>
    %71 = arith.divf %69, %70 : vector<16x96xf32>
    %72 = vector.extract_strided_slice %65 {offsets = [0, 96], sizes = [16, 32], strides = [1, 1]} : vector<16x128xf32> to vector<16x32xf32>
    %73 = math.tanh %72 : vector<16x32xf32>
    %74 = vector.extract_strided_slice %71 {offsets = [0, 0], sizes = [16, 32], strides = [1, 1]} : vector<16x96xf32> to vector<16x32xf32>
    %75 = vector.extract_strided_slice %71 {offsets = [0, 32], sizes = [16, 32], strides = [1, 1]} : vector<16x96xf32> to vector<16x32xf32>
    %76 = vector.extract_strided_slice %71 {offsets = [0, 64], sizes = [16, 32], strides = [1, 1]} : vector<16x96xf32> to vector<16x32xf32>
    %77 = arith.mulf %75, %54 : vector<16x32xf32>
    %78 = arith.mulf %74, %73 : vector<16x32xf32>
    %79 = arith.addf %77, %78 : vector<16x32xf32>
    %80 = math.tanh %79 : vector<16x32xf32>
    %81 = arith.mulf %76, %80 : vector<16x32xf32>
    %82 = arith.truncf %81 : vector<16x32xf32> to vector<16x32xbf16>
    %83 = arith.index_cast %61 : i32 to index
    %c0_24 = arith.constant 0 : index
    %84 = vector.load %arg11[%83, %c0_24] : memref<128x32xbf16, #tpu.memory_space<vmem>>, vector<16x32xbf16>
    tpu.vector_store %arg11[%83, %c0_24], %82 {strides = array<i32>} : memref<128x32xbf16, #tpu.memory_space<vmem>>, vector<16x32xbf16>,
    %c3_i32 = arith.constant 3 : i32
    %c16_i32_25 = arith.constant 16 : i32
    %85 = arith.muli %c3_i32, %c16_i32_25 : i32
    %86 = tpu.assume_multiple %85, 16 : i32
    %87 = arith.index_cast %86 : i32 to index
    %c0_26 = arith.constant 0 : index
    %88 = vector.load %arg10[%87, %c0_26] : memref<128x128xf32, #tpu.memory_space<vmem>>, vector<16x128xf32>
    %cst_27 = arith.constant dense<0.000000e+00> : vector<16x128xf32>
    %89 = tpu.matmul %82, %7, %cst_27 {dimension_numbers = #tpu.dot_dimension_numbers<[1], [0], [0], [1], [0, 0, 1, 1], [], []>} : vector<16x32xbf16>, vector<32x128xbf16>, vector<16x128xf32> -> vector<16x128xf32>
    %90 = arith.addf %88, %89 : vector<16x128xf32>
    %91 = vector.extract_strided_slice %90 {offsets = [0, 0], sizes = [16, 96], strides = [1, 1]} : vector<16x128xf32> to vector<16x96xf32>
    %92 = arith.negf %91 : vector<16x96xf32>
    %93 = math.exp %92 : vector<16x96xf32>
    %cst_28 = arith.constant 1.000000e+00 : f32
    %94 = vector.broadcast %cst_28 : f32 to vector<16x96xf32>
    %95 = arith.addf %94, %93 : vector<16x96xf32>
    %96 = arith.divf %94, %95 : vector<16x96xf32>
    %97 = vector.extract_strided_slice %90 {offsets = [0, 96], sizes = [16, 32], strides = [1, 1]} : vector<16x128xf32> to vector<16x32xf32>
    %98 = math.tanh %97 : vector<16x32xf32>
    %99 = vector.extract_strided_slice %96 {offsets = [0, 0], sizes = [16, 32], strides = [1, 1]} : vector<16x96xf32> to vector<16x32xf32>
    %100 = vector.extract_strided_slice %96 {offsets = [0, 32], sizes = [16, 32], strides = [1, 1]} : vector<16x96xf32> to vector<16x32xf32>
    %101 = vector.extract_strided_slice %96 {offsets = [0, 64], sizes = [16, 32], strides = [1, 1]} : vector<16x96xf32> to vector<16x32xf32>
    %102 = arith.mulf %100, %79 : vector<16x32xf32>
    %103 = arith.mulf %99, %98 : vector<16x32xf32>
    %104 = arith.addf %102, %103 : vector<16x32xf32>
    %105 = math.tanh %104 : vector<16x32xf32>
    %106 = arith.mulf %101, %105 : vector<16x32xf32>
    %107 = arith.truncf %106 : vector<16x32xf32> to vector<16x32xbf16>
    %108 = arith.index_cast %86 : i32 to index
    %c0_29 = arith.constant 0 : index
    %109 = vector.load %arg11[%108, %c0_29] : memref<128x32xbf16, #tpu.memory_space<vmem>>, vector<16x32xbf16>
    tpu.vector_store %arg11[%108, %c0_29], %107 {strides = array<i32>} : memref<128x32xbf16, #tpu.memory_space<vmem>>, vector<16x32xbf16>,
    %c4_i32 = arith.constant 4 : i32
    %c16_i32_30 = arith.constant 16 : i32
    %110 = arith.muli %c4_i32, %c16_i32_30 : i32
    %111 = tpu.assume_multiple %110, 16 : i32
    %112 = arith.index_cast %111 : i32 to index
    %c0_31 = arith.constant 0 : index
    %113 = vector.load %arg10[%112, %c0_31] : memref<128x128xf32, #tpu.memory_space<vmem>>, vector<16x128xf32>
    %cst_32 = arith.constant dense<0.000000e+00> : vector<16x128xf32>
    %114 = tpu.matmul %107, %7, %cst_32 {dimension_numbers = #tpu.dot_dimension_numbers<[1], [0], [0], [1], [0, 0, 1, 1], [], []>} : vector<16x32xbf16>, vector<32x128xbf16>, vector<16x128xf32> -> vector<16x128xf32>
    %115 = arith.addf %113, %114 : vector<16x128xf32>
    %116 = vector.extract_strided_slice %115 {offsets = [0, 0], sizes = [16, 96], strides = [1, 1]} : vector<16x128xf32> to vector<16x96xf32>
    %117 = arith.negf %116 : vector<16x96xf32>
    %118 = math.exp %117 : vector<16x96xf32>
    %cst_33 = arith.constant 1.000000e+00 : f32
    %119 = vector.broadcast %cst_33 : f32 to vector<16x96xf32>
    %120 = arith.addf %119, %118 : vector<16x96xf32>
    %121 = arith.divf %119, %120 : vector<16x96xf32>
    %122 = vector.extract_strided_slice %115 {offsets = [0, 96], sizes = [16, 32], strides = [1, 1]} : vector<16x128xf32> to vector<16x32xf32>
    %123 = math.tanh %122 : vector<16x32xf32>
    %124 = vector.extract_strided_slice %121 {offsets = [0, 0], sizes = [16, 32], strides = [1, 1]} : vector<16x96xf32> to vector<16x32xf32>
    %125 = vector.extract_strided_slice %121 {offsets = [0, 32], sizes = [16, 32], strides = [1, 1]} : vector<16x96xf32> to vector<16x32xf32>
    %126 = vector.extract_strided_slice %121 {offsets = [0, 64], sizes = [16, 32], strides = [1, 1]} : vector<16x96xf32> to vector<16x32xf32>
    %127 = arith.mulf %125, %104 : vector<16x32xf32>
    %128 = arith.mulf %124, %123 : vector<16x32xf32>
    %129 = arith.addf %127, %128 : vector<16x32xf32>
    %130 = math.tanh %129 : vector<16x32xf32>
    %131 = arith.mulf %126, %130 : vector<16x32xf32>
    %132 = arith.truncf %131 : vector<16x32xf32> to vector<16x32xbf16>
    %133 = arith.index_cast %111 : i32 to index
    %c0_34 = arith.constant 0 : index
    %134 = vector.load %arg11[%133, %c0_34] : memref<128x32xbf16, #tpu.memory_space<vmem>>, vector<16x32xbf16>
    tpu.vector_store %arg11[%133, %c0_34], %132 {strides = array<i32>} : memref<128x32xbf16, #tpu.memory_space<vmem>>, vector<16x32xbf16>,
    %c5_i32 = arith.constant 5 : i32
    %c16_i32_35 = arith.constant 16 : i32
    %135 = arith.muli %c5_i32, %c16_i32_35 : i32
    %136 = tpu.assume_multiple %135, 16 : i32
    %137 = arith.index_cast %136 : i32 to index
    %c0_36 = arith.constant 0 : index
    %138 = vector.load %arg10[%137, %c0_36] : memref<128x128xf32, #tpu.memory_space<vmem>>, vector<16x128xf32>
    %cst_37 = arith.constant dense<0.000000e+00> : vector<16x128xf32>
    %139 = tpu.matmul %132, %7, %cst_37 {dimension_numbers = #tpu.dot_dimension_numbers<[1], [0], [0], [1], [0, 0, 1, 1], [], []>} : vector<16x32xbf16>, vector<32x128xbf16>, vector<16x128xf32> -> vector<16x128xf32>
    %140 = arith.addf %138, %139 : vector<16x128xf32>
    %141 = vector.extract_strided_slice %140 {offsets = [0, 0], sizes = [16, 96], strides = [1, 1]} : vector<16x128xf32> to vector<16x96xf32>
    %142 = arith.negf %141 : vector<16x96xf32>
    %143 = math.exp %142 : vector<16x96xf32>
    %cst_38 = arith.constant 1.000000e+00 : f32
    %144 = vector.broadcast %cst_38 : f32 to vector<16x96xf32>
    %145 = arith.addf %144, %143 : vector<16x96xf32>
    %146 = arith.divf %144, %145 : vector<16x96xf32>
    %147 = vector.extract_strided_slice %140 {offsets = [0, 96], sizes = [16, 32], strides = [1, 1]} : vector<16x128xf32> to vector<16x32xf32>
    %148 = math.tanh %147 : vector<16x32xf32>
    %149 = vector.extract_strided_slice %146 {offsets = [0, 0], sizes = [16, 32], strides = [1, 1]} : vector<16x96xf32> to vector<16x32xf32>
    %150 = vector.extract_strided_slice %146 {offsets = [0, 32], sizes = [16, 32], strides = [1, 1]} : vector<16x96xf32> to vector<16x32xf32>
    %151 = vector.extract_strided_slice %146 {offsets = [0, 64], sizes = [16, 32], strides = [1, 1]} : vector<16x96xf32> to vector<16x32xf32>
    %152 = arith.mulf %150, %129 : vector<16x32xf32>
    %153 = arith.mulf %149, %148 : vector<16x32xf32>
    %154 = arith.addf %152, %153 : vector<16x32xf32>
    %155 = math.tanh %154 : vector<16x32xf32>
    %156 = arith.mulf %151, %155 : vector<16x32xf32>
    %157 = arith.truncf %156 : vector<16x32xf32> to vector<16x32xbf16>
    %158 = arith.index_cast %136 : i32 to index
    %c0_39 = arith.constant 0 : index
    %159 = vector.load %arg11[%158, %c0_39] : memref<128x32xbf16, #tpu.memory_space<vmem>>, vector<16x32xbf16>
    tpu.vector_store %arg11[%158, %c0_39], %157 {strides = array<i32>} : memref<128x32xbf16, #tpu.memory_space<vmem>>, vector<16x32xbf16>,
    %c6_i32 = arith.constant 6 : i32
    %c16_i32_40 = arith.constant 16 : i32
    %160 = arith.muli %c6_i32, %c16_i32_40 : i32
    %161 = tpu.assume_multiple %160, 16 : i32
    %162 = arith.index_cast %161 : i32 to index
    %c0_41 = arith.constant 0 : index
    %163 = vector.load %arg10[%162, %c0_41] : memref<128x128xf32, #tpu.memory_space<vmem>>, vector<16x128xf32>
    %cst_42 = arith.constant dense<0.000000e+00> : vector<16x128xf32>
    %164 = tpu.matmul %157, %7, %cst_42 {dimension_numbers = #tpu.dot_dimension_numbers<[1], [0], [0], [1], [0, 0, 1, 1], [], []>} : vector<16x32xbf16>, vector<32x128xbf16>, vector<16x128xf32> -> vector<16x128xf32>
    %165 = arith.addf %163, %164 : vector<16x128xf32>
    %166 = vector.extract_strided_slice %165 {offsets = [0, 0], sizes = [16, 96], strides = [1, 1]} : vector<16x128xf32> to vector<16x96xf32>
    %167 = arith.negf %166 : vector<16x96xf32>
    %168 = math.exp %167 : vector<16x96xf32>
    %cst_43 = arith.constant 1.000000e+00 : f32
    %169 = vector.broadcast %cst_43 : f32 to vector<16x96xf32>
    %170 = arith.addf %169, %168 : vector<16x96xf32>
    %171 = arith.divf %169, %170 : vector<16x96xf32>
    %172 = vector.extract_strided_slice %165 {offsets = [0, 96], sizes = [16, 32], strides = [1, 1]} : vector<16x128xf32> to vector<16x32xf32>
    %173 = math.tanh %172 : vector<16x32xf32>
    %174 = vector.extract_strided_slice %171 {offsets = [0, 0], sizes = [16, 32], strides = [1, 1]} : vector<16x96xf32> to vector<16x32xf32>
    %175 = vector.extract_strided_slice %171 {offsets = [0, 32], sizes = [16, 32], strides = [1, 1]} : vector<16x96xf32> to vector<16x32xf32>
    %176 = vector.extract_strided_slice %171 {offsets = [0, 64], sizes = [16, 32], strides = [1, 1]} : vector<16x96xf32> to vector<16x32xf32>
    %177 = arith.mulf %175, %154 : vector<16x32xf32>
    %178 = arith.mulf %174, %173 : vector<16x32xf32>
    %179 = arith.addf %177, %178 : vector<16x32xf32>
    %180 = math.tanh %179 : vector<16x32xf32>
    %181 = arith.mulf %176, %180 : vector<16x32xf32>
    %182 = arith.truncf %181 : vector<16x32xf32> to vector<16x32xbf16>
    %183 = arith.index_cast %161 : i32 to index
    %c0_44 = arith.constant 0 : index
    %184 = vector.load %arg11[%183, %c0_44] : memref<128x32xbf16, #tpu.memory_space<vmem>>, vector<16x32xbf16>
    tpu.vector_store %arg11[%183, %c0_44], %182 {strides = array<i32>} : memref<128x32xbf16, #tpu.memory_space<vmem>>, vector<16x32xbf16>,
    %c7_i32 = arith.constant 7 : i32
    %c16_i32_45 = arith.constant 16 : i32
    %185 = arith.muli %c7_i32, %c16_i32_45 : i32
    %186 = tpu.assume_multiple %185, 16 : i32
    %187 = arith.index_cast %186 : i32 to index
    %c0_46 = arith.constant 0 : index
    %188 = vector.load %arg10[%187, %c0_46] : memref<128x128xf32, #tpu.memory_space<vmem>>, vector<16x128xf32>
    %cst_47 = arith.constant dense<0.000000e+00> : vector<16x128xf32>
    %189 = tpu.matmul %182, %7, %cst_47 {dimension_numbers = #tpu.dot_dimension_numbers<[1], [0], [0], [1], [0, 0, 1, 1], [], []>} : vector<16x32xbf16>, vector<32x128xbf16>, vector<16x128xf32> -> vector<16x128xf32>
    %190 = arith.addf %188, %189 : vector<16x128xf32>
    %191 = vector.extract_strided_slice %190 {offsets = [0, 0], sizes = [16, 96], strides = [1, 1]} : vector<16x128xf32> to vector<16x96xf32>
    %192 = arith.negf %191 : vector<16x96xf32>
    %193 = math.exp %192 : vector<16x96xf32>
    %cst_48 = arith.constant 1.000000e+00 : f32
    %194 = vector.broadcast %cst_48 : f32 to vector<16x96xf32>
    %195 = arith.addf %194, %193 : vector<16x96xf32>
    %196 = arith.divf %194, %195 : vector<16x96xf32>
    %197 = vector.extract_strided_slice %190 {offsets = [0, 96], sizes = [16, 32], strides = [1, 1]} : vector<16x128xf32> to vector<16x32xf32>
    %198 = math.tanh %197 : vector<16x32xf32>
    %199 = vector.extract_strided_slice %196 {offsets = [0, 0], sizes = [16, 32], strides = [1, 1]} : vector<16x96xf32> to vector<16x32xf32>
    %200 = vector.extract_strided_slice %196 {offsets = [0, 32], sizes = [16, 32], strides = [1, 1]} : vector<16x96xf32> to vector<16x32xf32>
    %201 = vector.extract_strided_slice %196 {offsets = [0, 64], sizes = [16, 32], strides = [1, 1]} : vector<16x96xf32> to vector<16x32xf32>
    %202 = arith.mulf %200, %179 : vector<16x32xf32>
    %203 = arith.mulf %199, %198 : vector<16x32xf32>
    %204 = arith.addf %202, %203 : vector<16x32xf32>
    %205 = math.tanh %204 : vector<16x32xf32>
    %206 = arith.mulf %201, %205 : vector<16x32xf32>
    %207 = arith.truncf %206 : vector<16x32xf32> to vector<16x32xbf16>
    %208 = arith.index_cast %186 : i32 to index
    %c0_49 = arith.constant 0 : index
    %209 = vector.load %arg11[%208, %c0_49] : memref<128x32xbf16, #tpu.memory_space<vmem>>, vector<16x32xbf16>
    tpu.vector_store %arg11[%208, %c0_49], %207 {strides = array<i32>} : memref<128x32xbf16, #tpu.memory_space<vmem>>, vector<16x32xbf16>,
    %c8_i32 = arith.constant 8 : i32
    %c0_50 = arith.constant 0 : index
    %c0_51 = arith.constant 0 : index
    %210 = vector.load %arg11[%c0_50, %c0_51] : memref<128x32xbf16, #tpu.memory_space<vmem>>, vector<128x32xbf16>
    %c0_52 = arith.constant 0 : index
    %c0_53 = arith.constant 0 : index
    %211 = vector.load %arg4[%c0_52, %c0_53] : memref<32x128xbf16, #tpu.memory_space<vmem>>, vector<32x128xbf16>
    %cst_54 = arith.constant dense<0.000000e+00> : vector<128x128xf32>
    %212 = tpu.matmul %210, %211, %cst_54 {dimension_numbers = #tpu.dot_dimension_numbers<[1], [0], [0], [1], [0, 0, 1, 1], [], []>} : vector<128x32xbf16>, vector<32x128xbf16>, vector<128x128xf32> -> vector<128x128xf32>
    %c0_55 = arith.constant 0 : index
    %c0_56 = arith.constant 0 : index
    %213 = vector.load %arg6[%c0_55, %c0_56] : memref<1x128xf32, #tpu.memory_space<vmem>>, vector<1x128xf32>
    %214 = vector.broadcast %213 : vector<1x128xf32> to vector<128x128xf32>
    %215 = arith.addf %212, %214 : vector<128x128xf32>
    %c0_57 = arith.constant 0 : index
    %c0_58 = arith.constant 0 : index
    %216 = vector.load %arg10[%c0_57, %c0_58] : memref<128x128xf32, #tpu.memory_space<vmem>>, vector<128x128xf32>
    tpu.vector_store %arg10[%c0_57, %c0_58], %215 {strides = array<i32>} : memref<128x128xf32, #tpu.memory_space<vmem>>, vector<128x128xf32>,
    %c0_59 = arith.constant 0 : index
    %c0_60 = arith.constant 0 : index
    %217 = vector.load %arg5[%c0_59, %c0_60] : memref<32x128xbf16, #tpu.memory_space<vmem>>, vector<32x128xbf16>
    %cst_61 = arith.constant 0.000000e+00 : bf16
    %218 = vector.broadcast %cst_61 : bf16 to vector<16x32xbf16>
    %cst_62 = arith.constant 0.000000e+00 : f32
    %219 = vector.broadcast %cst_62 : f32 to vector<16x32xf32>
    %c0_i32_63 = arith.constant 0 : i32
    %c16_i32_64 = arith.constant 16 : i32
    %220 = arith.muli %c0_i32_63, %c16_i32_64 : i32
    %221 = tpu.assume_multiple %220, 16 : i32
    %222 = arith.index_cast %221 : i32 to index
    %c0_65 = arith.constant 0 : index
    %223 = vector.load %arg10[%222, %c0_65] : memref<128x128xf32, #tpu.memory_space<vmem>>, vector<16x128xf32>
    %cst_66 = arith.constant dense<0.000000e+00> : vector<16x128xf32>
    %224 = tpu.matmul %218, %217, %cst_66 {dimension_numbers = #tpu.dot_dimension_numbers<[1], [0], [0], [1], [0, 0, 1, 1], [], []>} : vector<16x32xbf16>, vector<32x128xbf16>, vector<16x128xf32> -> vector<16x128xf32>
    %225 = arith.addf %223, %224 : vector<16x128xf32>
    %226 = vector.extract_strided_slice %225 {offsets = [0, 0], sizes = [16, 96], strides = [1, 1]} : vector<16x128xf32> to vector<16x96xf32>
    %227 = arith.negf %226 : vector<16x96xf32>
    %228 = math.exp %227 : vector<16x96xf32>
    %cst_67 = arith.constant 1.000000e+00 : f32
    %229 = vector.broadcast %cst_67 : f32 to vector<16x96xf32>
    %230 = arith.addf %229, %228 : vector<16x96xf32>
    %231 = arith.divf %229, %230 : vector<16x96xf32>
    %232 = vector.extract_strided_slice %225 {offsets = [0, 96], sizes = [16, 32], strides = [1, 1]} : vector<16x128xf32> to vector<16x32xf32>
    %233 = math.tanh %232 : vector<16x32xf32>
    %234 = vector.extract_strided_slice %231 {offsets = [0, 0], sizes = [16, 32], strides = [1, 1]} : vector<16x96xf32> to vector<16x32xf32>
    %235 = vector.extract_strided_slice %231 {offsets = [0, 32], sizes = [16, 32], strides = [1, 1]} : vector<16x96xf32> to vector<16x32xf32>
    %236 = vector.extract_strided_slice %231 {offsets = [0, 64], sizes = [16, 32], strides = [1, 1]} : vector<16x96xf32> to vector<16x32xf32>
    %237 = arith.mulf %235, %219 : vector<16x32xf32>
    %238 = arith.mulf %234, %233 : vector<16x32xf32>
    %239 = arith.addf %237, %238 : vector<16x32xf32>
    %240 = math.tanh %239 : vector<16x32xf32>
    %241 = arith.mulf %236, %240 : vector<16x32xf32>
    %242 = arith.truncf %241 : vector<16x32xf32> to vector<16x32xbf16>
    %c1_i32_68 = arith.constant 1 : i32
    %c16_i32_69 = arith.constant 16 : i32
    %243 = arith.muli %c1_i32_68, %c16_i32_69 : i32
    %244 = tpu.assume_multiple %243, 16 : i32
    %245 = arith.index_cast %244 : i32 to index
    %c0_70 = arith.constant 0 : index
    %246 = vector.load %arg10[%245, %c0_70] : memref<128x128xf32, #tpu.memory_space<vmem>>, vector<16x128xf32>
    %cst_71 = arith.constant dense<0.000000e+00> : vector<16x128xf32>
    %247 = tpu.matmul %242, %217, %cst_71 {dimension_numbers = #tpu.dot_dimension_numbers<[1], [0], [0], [1], [0, 0, 1, 1], [], []>} : vector<16x32xbf16>, vector<32x128xbf16>, vector<16x128xf32> -> vector<16x128xf32>
    %248 = arith.addf %246, %247 : vector<16x128xf32>
    %249 = vector.extract_strided_slice %248 {offsets = [0, 0], sizes = [16, 96], strides = [1, 1]} : vector<16x128xf32> to vector<16x96xf32>
    %250 = arith.negf %249 : vector<16x96xf32>
    %251 = math.exp %250 : vector<16x96xf32>
    %cst_72 = arith.constant 1.000000e+00 : f32
    %252 = vector.broadcast %cst_72 : f32 to vector<16x96xf32>
    %253 = arith.addf %252, %251 : vector<16x96xf32>
    %254 = arith.divf %252, %253 : vector<16x96xf32>
    %255 = vector.extract_strided_slice %248 {offsets = [0, 96], sizes = [16, 32], strides = [1, 1]} : vector<16x128xf32> to vector<16x32xf32>
    %256 = math.tanh %255 : vector<16x32xf32>
    %257 = vector.extract_strided_slice %254 {offsets = [0, 0], sizes = [16, 32], strides = [1, 1]} : vector<16x96xf32> to vector<16x32xf32>
    %258 = vector.extract_strided_slice %254 {offsets = [0, 32], sizes = [16, 32], strides = [1, 1]} : vector<16x96xf32> to vector<16x32xf32>
    %259 = vector.extract_strided_slice %254 {offsets = [0, 64], sizes = [16, 32], strides = [1, 1]} : vector<16x96xf32> to vector<16x32xf32>
    %260 = arith.mulf %258, %239 : vector<16x32xf32>
    %261 = arith.mulf %257, %256 : vector<16x32xf32>
    %262 = arith.addf %260, %261 : vector<16x32xf32>
    %263 = math.tanh %262 : vector<16x32xf32>
    %264 = arith.mulf %259, %263 : vector<16x32xf32>
    %265 = arith.truncf %264 : vector<16x32xf32> to vector<16x32xbf16>
    %c2_i32_73 = arith.constant 2 : i32
    %c16_i32_74 = arith.constant 16 : i32
    %266 = arith.muli %c2_i32_73, %c16_i32_74 : i32
    %267 = tpu.assume_multiple %266, 16 : i32
    %268 = arith.index_cast %267 : i32 to index
    %c0_75 = arith.constant 0 : index
    %269 = vector.load %arg10[%268, %c0_75] : memref<128x128xf32, #tpu.memory_space<vmem>>, vector<16x128xf32>
    %cst_76 = arith.constant dense<0.000000e+00> : vector<16x128xf32>
    %270 = tpu.matmul %265, %217, %cst_76 {dimension_numbers = #tpu.dot_dimension_numbers<[1], [0], [0], [1], [0, 0, 1, 1], [], []>} : vector<16x32xbf16>, vector<32x128xbf16>, vector<16x128xf32> -> vector<16x128xf32>
    %271 = arith.addf %269, %270 : vector<16x128xf32>
    %272 = vector.extract_strided_slice %271 {offsets = [0, 0], sizes = [16, 96], strides = [1, 1]} : vector<16x128xf32> to vector<16x96xf32>
    %273 = arith.negf %272 : vector<16x96xf32>
    %274 = math.exp %273 : vector<16x96xf32>
    %cst_77 = arith.constant 1.000000e+00 : f32
    %275 = vector.broadcast %cst_77 : f32 to vector<16x96xf32>
    %276 = arith.addf %275, %274 : vector<16x96xf32>
    %277 = arith.divf %275, %276 : vector<16x96xf32>
    %278 = vector.extract_strided_slice %271 {offsets = [0, 96], sizes = [16, 32], strides = [1, 1]} : vector<16x128xf32> to vector<16x32xf32>
    %279 = math.tanh %278 : vector<16x32xf32>
    %280 = vector.extract_strided_slice %277 {offsets = [0, 0], sizes = [16, 32], strides = [1, 1]} : vector<16x96xf32> to vector<16x32xf32>
    %281 = vector.extract_strided_slice %277 {offsets = [0, 32], sizes = [16, 32], strides = [1, 1]} : vector<16x96xf32> to vector<16x32xf32>
    %282 = vector.extract_strided_slice %277 {offsets = [0, 64], sizes = [16, 32], strides = [1, 1]} : vector<16x96xf32> to vector<16x32xf32>
    %283 = arith.mulf %281, %262 : vector<16x32xf32>
    %284 = arith.mulf %280, %279 : vector<16x32xf32>
    %285 = arith.addf %283, %284 : vector<16x32xf32>
    %286 = math.tanh %285 : vector<16x32xf32>
    %287 = arith.mulf %282, %286 : vector<16x32xf32>
    %288 = arith.truncf %287 : vector<16x32xf32> to vector<16x32xbf16>
    %c3_i32_78 = arith.constant 3 : i32
    %c16_i32_79 = arith.constant 16 : i32
    %289 = arith.muli %c3_i32_78, %c16_i32_79 : i32
    %290 = tpu.assume_multiple %289, 16 : i32
    %291 = arith.index_cast %290 : i32 to index
    %c0_80 = arith.constant 0 : index
    %292 = vector.load %arg10[%291, %c0_80] : memref<128x128xf32, #tpu.memory_space<vmem>>, vector<16x128xf32>
    %cst_81 = arith.constant dense<0.000000e+00> : vector<16x128xf32>
    %293 = tpu.matmul %288, %217, %cst_81 {dimension_numbers = #tpu.dot_dimension_numbers<[1], [0], [0], [1], [0, 0, 1, 1], [], []>} : vector<16x32xbf16>, vector<32x128xbf16>, vector<16x128xf32> -> vector<16x128xf32>
    %294 = arith.addf %292, %293 : vector<16x128xf32>
    %295 = vector.extract_strided_slice %294 {offsets = [0, 0], sizes = [16, 96], strides = [1, 1]} : vector<16x128xf32> to vector<16x96xf32>
    %296 = arith.negf %295 : vector<16x96xf32>
    %297 = math.exp %296 : vector<16x96xf32>
    %cst_82 = arith.constant 1.000000e+00 : f32
    %298 = vector.broadcast %cst_82 : f32 to vector<16x96xf32>
    %299 = arith.addf %298, %297 : vector<16x96xf32>
    %300 = arith.divf %298, %299 : vector<16x96xf32>
    %301 = vector.extract_strided_slice %294 {offsets = [0, 96], sizes = [16, 32], strides = [1, 1]} : vector<16x128xf32> to vector<16x32xf32>
    %302 = math.tanh %301 : vector<16x32xf32>
    %303 = vector.extract_strided_slice %300 {offsets = [0, 0], sizes = [16, 32], strides = [1, 1]} : vector<16x96xf32> to vector<16x32xf32>
    %304 = vector.extract_strided_slice %300 {offsets = [0, 32], sizes = [16, 32], strides = [1, 1]} : vector<16x96xf32> to vector<16x32xf32>
    %305 = vector.extract_strided_slice %300 {offsets = [0, 64], sizes = [16, 32], strides = [1, 1]} : vector<16x96xf32> to vector<16x32xf32>
    %306 = arith.mulf %304, %285 : vector<16x32xf32>
    %307 = arith.mulf %303, %302 : vector<16x32xf32>
    %308 = arith.addf %306, %307 : vector<16x32xf32>
    %309 = math.tanh %308 : vector<16x32xf32>
    %310 = arith.mulf %305, %309 : vector<16x32xf32>
    %311 = arith.truncf %310 : vector<16x32xf32> to vector<16x32xbf16>
    %c4_i32_83 = arith.constant 4 : i32
    %c16_i32_84 = arith.constant 16 : i32
    %312 = arith.muli %c4_i32_83, %c16_i32_84 : i32
    %313 = tpu.assume_multiple %312, 16 : i32
    %314 = arith.index_cast %313 : i32 to index
    %c0_85 = arith.constant 0 : index
    %315 = vector.load %arg10[%314, %c0_85] : memref<128x128xf32, #tpu.memory_space<vmem>>, vector<16x128xf32>
    %cst_86 = arith.constant dense<0.000000e+00> : vector<16x128xf32>
    %316 = tpu.matmul %311, %217, %cst_86 {dimension_numbers = #tpu.dot_dimension_numbers<[1], [0], [0], [1], [0, 0, 1, 1], [], []>} : vector<16x32xbf16>, vector<32x128xbf16>, vector<16x128xf32> -> vector<16x128xf32>
    %317 = arith.addf %315, %316 : vector<16x128xf32>
    %318 = vector.extract_strided_slice %317 {offsets = [0, 0], sizes = [16, 96], strides = [1, 1]} : vector<16x128xf32> to vector<16x96xf32>
    %319 = arith.negf %318 : vector<16x96xf32>
    %320 = math.exp %319 : vector<16x96xf32>
    %cst_87 = arith.constant 1.000000e+00 : f32
    %321 = vector.broadcast %cst_87 : f32 to vector<16x96xf32>
    %322 = arith.addf %321, %320 : vector<16x96xf32>
    %323 = arith.divf %321, %322 : vector<16x96xf32>
    %324 = vector.extract_strided_slice %317 {offsets = [0, 96], sizes = [16, 32], strides = [1, 1]} : vector<16x128xf32> to vector<16x32xf32>
    %325 = math.tanh %324 : vector<16x32xf32>
    %326 = vector.extract_strided_slice %323 {offsets = [0, 0], sizes = [16, 32], strides = [1, 1]} : vector<16x96xf32> to vector<16x32xf32>
    %327 = vector.extract_strided_slice %323 {offsets = [0, 32], sizes = [16, 32], strides = [1, 1]} : vector<16x96xf32> to vector<16x32xf32>
    %328 = vector.extract_strided_slice %323 {offsets = [0, 64], sizes = [16, 32], strides = [1, 1]} : vector<16x96xf32> to vector<16x32xf32>
    %329 = arith.mulf %327, %308 : vector<16x32xf32>
    %330 = arith.mulf %326, %325 : vector<16x32xf32>
    %331 = arith.addf %329, %330 : vector<16x32xf32>
    %332 = math.tanh %331 : vector<16x32xf32>
    %333 = arith.mulf %328, %332 : vector<16x32xf32>
    %334 = arith.truncf %333 : vector<16x32xf32> to vector<16x32xbf16>
    %c5_i32_88 = arith.constant 5 : i32
    %c16_i32_89 = arith.constant 16 : i32
    %335 = arith.muli %c5_i32_88, %c16_i32_89 : i32
    %336 = tpu.assume_multiple %335, 16 : i32
    %337 = arith.index_cast %336 : i32 to index
    %c0_90 = arith.constant 0 : index
    %338 = vector.load %arg10[%337, %c0_90] : memref<128x128xf32, #tpu.memory_space<vmem>>, vector<16x128xf32>
    %cst_91 = arith.constant dense<0.000000e+00> : vector<16x128xf32>
    %339 = tpu.matmul %334, %217, %cst_91 {dimension_numbers = #tpu.dot_dimension_numbers<[1], [0], [0], [1], [0, 0, 1, 1], [], []>} : vector<16x32xbf16>, vector<32x128xbf16>, vector<16x128xf32> -> vector<16x128xf32>
    %340 = arith.addf %338, %339 : vector<16x128xf32>
    %341 = vector.extract_strided_slice %340 {offsets = [0, 0], sizes = [16, 96], strides = [1, 1]} : vector<16x128xf32> to vector<16x96xf32>
    %342 = arith.negf %341 : vector<16x96xf32>
    %343 = math.exp %342 : vector<16x96xf32>
    %cst_92 = arith.constant 1.000000e+00 : f32
    %344 = vector.broadcast %cst_92 : f32 to vector<16x96xf32>
    %345 = arith.addf %344, %343 : vector<16x96xf32>
    %346 = arith.divf %344, %345 : vector<16x96xf32>
    %347 = vector.extract_strided_slice %340 {offsets = [0, 96], sizes = [16, 32], strides = [1, 1]} : vector<16x128xf32> to vector<16x32xf32>
    %348 = math.tanh %347 : vector<16x32xf32>
    %349 = vector.extract_strided_slice %346 {offsets = [0, 0], sizes = [16, 32], strides = [1, 1]} : vector<16x96xf32> to vector<16x32xf32>
    %350 = vector.extract_strided_slice %346 {offsets = [0, 32], sizes = [16, 32], strides = [1, 1]} : vector<16x96xf32> to vector<16x32xf32>
    %351 = vector.extract_strided_slice %346 {offsets = [0, 64], sizes = [16, 32], strides = [1, 1]} : vector<16x96xf32> to vector<16x32xf32>
    %352 = arith.mulf %350, %331 : vector<16x32xf32>
    %353 = arith.mulf %349, %348 : vector<16x32xf32>
    %354 = arith.addf %352, %353 : vector<16x32xf32>
    %355 = math.tanh %354 : vector<16x32xf32>
    %356 = arith.mulf %351, %355 : vector<16x32xf32>
    %357 = arith.truncf %356 : vector<16x32xf32> to vector<16x32xbf16>
    %c6_i32_93 = arith.constant 6 : i32
    %c16_i32_94 = arith.constant 16 : i32
    %358 = arith.muli %c6_i32_93, %c16_i32_94 : i32
    %359 = tpu.assume_multiple %358, 16 : i32
    %360 = arith.index_cast %359 : i32 to index
    %c0_95 = arith.constant 0 : index
    %361 = vector.load %arg10[%360, %c0_95] : memref<128x128xf32, #tpu.memory_space<vmem>>, vector<16x128xf32>
    %cst_96 = arith.constant dense<0.000000e+00> : vector<16x128xf32>
    %362 = tpu.matmul %357, %217, %cst_96 {dimension_numbers = #tpu.dot_dimension_numbers<[1], [0], [0], [1], [0, 0, 1, 1], [], []>} : vector<16x32xbf16>, vector<32x128xbf16>, vector<16x128xf32> -> vector<16x128xf32>
    %363 = arith.addf %361, %362 : vector<16x128xf32>
    %364 = vector.extract_strided_slice %363 {offsets = [0, 0], sizes = [16, 96], strides = [1, 1]} : vector<16x128xf32> to vector<16x96xf32>
    %365 = arith.negf %364 : vector<16x96xf32>
    %366 = math.exp %365 : vector<16x96xf32>
    %cst_97 = arith.constant 1.000000e+00 : f32
    %367 = vector.broadcast %cst_97 : f32 to vector<16x96xf32>
    %368 = arith.addf %367, %366 : vector<16x96xf32>
    %369 = arith.divf %367, %368 : vector<16x96xf32>
    %370 = vector.extract_strided_slice %363 {offsets = [0, 96], sizes = [16, 32], strides = [1, 1]} : vector<16x128xf32> to vector<16x32xf32>
    %371 = math.tanh %370 : vector<16x32xf32>
    %372 = vector.extract_strided_slice %369 {offsets = [0, 0], sizes = [16, 32], strides = [1, 1]} : vector<16x96xf32> to vector<16x32xf32>
    %373 = vector.extract_strided_slice %369 {offsets = [0, 32], sizes = [16, 32], strides = [1, 1]} : vector<16x96xf32> to vector<16x32xf32>
    %374 = vector.extract_strided_slice %369 {offsets = [0, 64], sizes = [16, 32], strides = [1, 1]} : vector<16x96xf32> to vector<16x32xf32>
    %375 = arith.mulf %373, %354 : vector<16x32xf32>
    %376 = arith.mulf %372, %371 : vector<16x32xf32>
    %377 = arith.addf %375, %376 : vector<16x32xf32>
    %378 = math.tanh %377 : vector<16x32xf32>
    %379 = arith.mulf %374, %378 : vector<16x32xf32>
    %380 = arith.truncf %379 : vector<16x32xf32> to vector<16x32xbf16>
    %c7_i32_98 = arith.constant 7 : i32
    %c16_i32_99 = arith.constant 16 : i32
    %381 = arith.muli %c7_i32_98, %c16_i32_99 : i32
    %382 = tpu.assume_multiple %381, 16 : i32
    %383 = arith.index_cast %382 : i32 to index
    %c0_100 = arith.constant 0 : index
    %384 = vector.load %arg10[%383, %c0_100] : memref<128x128xf32, #tpu.memory_space<vmem>>, vector<16x128xf32>
    %cst_101 = arith.constant dense<0.000000e+00> : vector<16x128xf32>
    %385 = tpu.matmul %380, %217, %cst_101 {dimension_numbers = #tpu.dot_dimension_numbers<[1], [0], [0], [1], [0, 0, 1, 1], [], []>} : vector<16x32xbf16>, vector<32x128xbf16>, vector<16x128xf32> -> vector<16x128xf32>
    %386 = arith.addf %384, %385 : vector<16x128xf32>
    %387 = vector.extract_strided_slice %386 {offsets = [0, 0], sizes = [16, 96], strides = [1, 1]} : vector<16x128xf32> to vector<16x96xf32>
    %388 = arith.negf %387 : vector<16x96xf32>
    %389 = math.exp %388 : vector<16x96xf32>
    %cst_102 = arith.constant 1.000000e+00 : f32
    %390 = vector.broadcast %cst_102 : f32 to vector<16x96xf32>
    %391 = arith.addf %390, %389 : vector<16x96xf32>
    %392 = arith.divf %390, %391 : vector<16x96xf32>
    %393 = vector.extract_strided_slice %386 {offsets = [0, 96], sizes = [16, 32], strides = [1, 1]} : vector<16x128xf32> to vector<16x32xf32>
    %394 = math.tanh %393 : vector<16x32xf32>
    %395 = vector.extract_strided_slice %392 {offsets = [0, 0], sizes = [16, 32], strides = [1, 1]} : vector<16x96xf32> to vector<16x32xf32>
    %396 = vector.extract_strided_slice %392 {offsets = [0, 32], sizes = [16, 32], strides = [1, 1]} : vector<16x96xf32> to vector<16x32xf32>
    %397 = vector.extract_strided_slice %392 {offsets = [0, 64], sizes = [16, 32], strides = [1, 1]} : vector<16x96xf32> to vector<16x32xf32>
    %398 = arith.mulf %396, %377 : vector<16x32xf32>
    %399 = arith.mulf %395, %394 : vector<16x32xf32>
    %400 = arith.addf %398, %399 : vector<16x32xf32>
    %401 = math.tanh %400 : vector<16x32xf32>
    %402 = arith.mulf %397, %401 : vector<16x32xf32>
    %403 = arith.truncf %402 : vector<16x32xf32> to vector<16x32xbf16>
    %c8_i32_103 = arith.constant 8 : i32
    %c0_104 = arith.constant 0 : index
    %c0_105 = arith.constant 0 : index
    %404 = vector.load %arg7[%c0_104, %c0_105] : memref<32x10xbf16, #tpu.memory_space<vmem>>, vector<32x10xbf16>
    %cst_106 = arith.constant dense<0.000000e+00> : vector<16x10xf32>
    %405 = tpu.matmul %403, %404, %cst_106 {dimension_numbers = #tpu.dot_dimension_numbers<[1], [0], [0], [1], [0, 0, 1, 1], [], []>} : vector<16x32xbf16>, vector<32x10xbf16>, vector<16x10xf32> -> vector<16x10xf32>
    %c0_107 = arith.constant 0 : index
    %c0_108 = arith.constant 0 : index
    %406 = vector.load %arg8[%c0_107, %c0_108] : memref<1x10xf32, #tpu.memory_space<vmem>>, vector<1x10xf32>
    %407 = vector.broadcast %406 : vector<1x10xf32> to vector<16x10xf32>
    %408 = arith.addf %405, %407 : vector<16x10xf32>
    %c0_109 = arith.constant 0 : index
    %c0_110 = arith.constant 0 : index
    %409 = vector.load %arg9[%c0_109, %c0_110] : memref<16x10xf32, #tpu.memory_space<vmem>>, vector<16x10xf32>
    tpu.vector_store %arg9[%c0_109, %c0_110], %408 {strides = array<i32>} : memref<16x10xf32, #tpu.memory_space<vmem>>, vector<16x10xf32>,
    return
  }
}

</mosaic_0001>

<llo_original>
// kernel: my_lstm_forward.1
$region0: #{my_lstm_forward.1}
  #allocation0 [shape = 'u32[]', space=smem, size = 0x4, offset = 0x4, fixed_abs, tag = 'smem constant byte address 0x4 - core index']
  #allocation1 [shape = 'u32[144,128]{1,0:T(1,128)}', space=vmem, size = 0x12000, scoped, tag = 'internal scratch']
  #allocation2 [shape = 'f32[128,128]{1,0:T(8,128)}', space=vmem, size = 0x10000, scoped, tag = 'scratch operand']
  #allocation3 [shape = 'bf16[128,32]{1,0:T(8,128)(2,1)}', space=vmem, size = 0x8000, scoped, tag = 'scratch operand']
  %s0 = inlined_call_operand.vmem [shape: bf16[128,16], index: 0, kind: input, shape index: {}]
  %s1 = inlined_call_operand.vmem [shape: bf16[16,128], index: 1, kind: input, shape index: {}]
  %s2 = inlined_call_operand.vmem [shape: bf16[32,128], index: 2, kind: input, shape index: {}]
  %s3 = inlined_call_operand.vmem [shape: f32[1,128], index: 3, kind: input, shape index: {}]
  %s4 = inlined_call_operand.vmem [shape: bf16[32,128], index: 4, kind: input, shape index: {}]
  %s5 = inlined_call_operand.vmem [shape: bf16[32,128], index: 5, kind: input, shape index: {}]
  %s6 = inlined_call_operand.vmem [shape: f32[1,128], index: 6, kind: input, shape index: {}]
  %s7 = inlined_call_operand.vmem [shape: bf16[32,10], index: 7, kind: input, shape index: {}]
  %s8 = inlined_call_operand.vmem [shape: f32[1,10], index: 8, kind: input, shape index: {}]
  %s9 = inlined_call_operand.vmem [shape: f32[16,10], index: 9, kind: output, shape index: {}]
  %s10 = sld [smem:[#allocation0]]
  $region46: #{my_lstm_forward.1} parent=0
    _
  %s12 = ssub.s32 1, %s10
  %s13 = scalar_select 0, %s12, %s10
  // Predicated region
  $region2: #{my_lstm_forward.1} parent=0 // pred_check
    _
  $region3: #{my_lstm_forward.1} parent=0 // pred_check_branch
    %15 = sbr.rel (0) target = $region5
  $region4: #{my_lstm_forward.1} parent=0 // pred_region
    _
  $region5: #{my_lstm_forward.1} parent=0 // pred_fallthru
    _
  // Predicated region
  $region6: #{my_lstm_forward.1} parent=0 // pred_check
    _
  $region7: #{my_lstm_forward.1} parent=0 // pred_check_branch
    %17 = sbr.rel (0) target = $region9
  $region8: #{my_lstm_forward.1} parent=0 // pred_region
    _
  $region9: #{my_lstm_forward.1} parent=0 // pred_fallthru
    _
  // Predicated region
  $region10: #{my_lstm_forward.1} parent=0 // pred_check
    _
  $region11: #{my_lstm_forward.1} parent=0 // pred_check_branch
    %19 = sbr.rel (0) target = $region13
  $region12: #{my_lstm_forward.1} parent=0 // pred_region
    _
  $region13: #{my_lstm_forward.1} parent=0 // pred_fallthru
    _
  // Predicated region
  $region14: #{my_lstm_forward.1} parent=0 // pred_check
    _
  $region15: #{my_lstm_forward.1} parent=0 // pred_check_branch
    %21 = sbr.rel (0) target = $region17
  $region16: #{my_lstm_forward.1} parent=0 // pred_region
    _
  $region17: #{my_lstm_forward.1} parent=0 // pred_fallthru
    _
  // Predicated region
  $region18: #{my_lstm_forward.1} parent=0 // pred_check
    _
  $region19: #{my_lstm_forward.1} parent=0 // pred_check_branch
    %23 = sbr.rel (0) target = $region21
  $region20: #{my_lstm_forward.1} parent=0 // pred_region
    _
  $region21: #{my_lstm_forward.1} parent=0 // pred_fallthru
    _
  // Predicated region
  $region22: #{my_lstm_forward.1} parent=0 // pred_check
    _
  $region23: #{my_lstm_forward.1} parent=0 // pred_check_branch
    %25 = sbr.rel (0) target = $region25
  $region24: #{my_lstm_forward.1} parent=0 // pred_region
    _
  $region25: #{my_lstm_forward.1} parent=0 // pred_fallthru
    _
  // Predicated region
  $region26: #{my_lstm_forward.1} parent=0 // pred_check
    _
  $region27: #{my_lstm_forward.1} parent=0 // pred_check_branch
    %27 = sbr.rel (0) target = $region29
  $region28: #{my_lstm_forward.1} parent=0 // pred_region
    _
  $region29: #{my_lstm_forward.1} parent=0 // pred_fallthru
    _
  // Predicated region
  $region30: #{my_lstm_forward.1} parent=0 // pred_check
    _
  $region31: #{my_lstm_forward.1} parent=0 // pred_check_branch
    %29 = sbr.rel (0) target = $region33
  $region32: #{my_lstm_forward.1} parent=0 // pred_region
    _
  $region33: #{my_lstm_forward.1} parent=0 // pred_fallthru
    _
  // Predicated region
  $region34: #{my_lstm_forward.1} parent=0 // pred_check
    _
  $region35: #{my_lstm_forward.1} parent=0 // pred_check_branch
    %31 = sbr.rel (0) target = $region37
  $region36: #{my_lstm_forward.1} parent=0 // pred_region
    _
  $region37: #{my_lstm_forward.1} parent=0 // pred_fallthru
    _
  %v33 = vld [vmem:[%s0] sm:$0xf]
  %v34 = vld [vmem:[%s0 + $0x4] sm:$0xf]
  %v35 = vld [vmem:[%s0 + $0x8] sm:$0xf]
  %v36 = vld [vmem:[%s0 + $0xc] sm:$0xf]
  %v37 = vld [vmem:[%s0 + $0x10] sm:$0xf]
  %v38 = vld [vmem:[%s0 + $0x14] sm:$0xf]
  %v39 = vld [vmem:[%s0 + $0x18] sm:$0xf]
  %v40 = vld [vmem:[%s0 + $0x1c] sm:$0xf]
  %v41 = vld [vmem:[%s0 + $0x20] sm:$0xf]
  %v42 = vld [vmem:[%s0 + $0x24] sm:$0xf]
  %v43 = vld [vmem:[%s0 + $0x28] sm:$0xf]
  %v44 = vld [vmem:[%s0 + $0x2c] sm:$0xf]
  %v45 = vld [vmem:[%s0 + $0x30] sm:$0xf]
  %v46 = vld [vmem:[%s0 + $0x34] sm:$0xf]
  %v47 = vld [vmem:[%s0 + $0x38] sm:$0xf]
  %v48 = vld [vmem:[%s0 + $0x3c] sm:$0xf]
  %v49 = vld [vmem:[%s1] sm:$0xf]
  %v50 = vld [vmem:[%s1 + $0x4] sm:$0xf]
  %v51 = vld [vmem:[%s3] sm:$0x1]
  %v53 = vlaneseq
  %v54 = vshrl.u32 %v53, 7
  %v55 = vsub.s32 0, %v54
  %v56 = vrot.slane %v51, %v55
  %v74 = vunpack.c.l.b16 %v33
  %v75 = vunpack.c.l.b16 %v34
  %v76 = vunpack.c.l.b16 %v35
  %v77 = vunpack.c.l.b16 %v36
  %v78 = vunpack.c.l.b16 %v37
  %v79 = vunpack.c.l.b16 %v38
  %v80 = vunpack.c.l.b16 %v39
  %v81 = vunpack.c.l.b16 %v40
  %v82 = vunpack.c.l.b16 %v41
  %v83 = vunpack.c.l.b16 %v42
  %v84 = vunpack.c.l.b16 %v43
  %v85 = vunpack.c.l.b16 %v44
  %v86 = vunpack.c.l.b16 %v45
  %v87 = vunpack.c.l.b16 %v46
  %v88 = vunpack.c.l.b16 %v47
  %v89 = vunpack.c.l.b16 %v48
  %v90 = vpack.c.b16 %v75, %v74
  %v91 = vpack.c.b16 %v77, %v76
  %v92 = vpack.c.b16 %v79, %v78
  %v93 = vpack.c.b16 %v81, %v80
  %v94 = vpack.c.b16 %v83, %v82
  %v95 = vpack.c.b16 %v85, %v84
  %v96 = vpack.c.b16 %v87, %v86
  %v97 = vpack.c.b16 %v89, %v88
  %v100 = vunpack.c.l.b16 %v49
  %v101 = vunpack.c.l.b16 %v50
  %v102 = vpack.c.b16 %v101, %v100
  %vm104 = vcmask 130048
  %v106 = vsel %vm104, %v90, 0
  %v109 = vsel %vm104, %v91, 0
  %v112 = vsel %vm104, %v92, 0
  %v115 = vsel %vm104, %v93, 0
  %v118 = vsel %vm104, %v94, 0
  %v121 = vsel %vm104, %v95, 0
  %v124 = vsel %vm104, %v96, 0
  %v127 = vsel %vm104, %v97, 0
  %129 = vmatprep.subr.bf16.mxu0 0
  %130 = vmatpush1.bf16.msra.mxu0 0
  %131 = vmatprep.subr.bf16.mxu0 0
  %132 = vmatpush1.bf16.msra.mxu0 0
  %133 = vmatprep.subr.bf16.mxu0 0
  %134 = vmatpush1.bf16.msra.mxu0 0
  %135 = vmatprep.subr.bf16.mxu0 0
  %136 = vmatpush1.bf16.msra.mxu0 0
  %137 = vmatprep.subr.bf16.mxu0 0
  %138 = vmatpush1.bf16.msra.mxu0 0
  %139 = vmatprep.subr.bf16.mxu0 0
  %140 = vmatpush1.bf16.msra.mxu0 0
  %141 = vmatprep.subr.bf16.mxu0 0
  %142 = vmatpush1.bf16.msra.mxu0 0
  %143 = vmatprep.subr.bf16.mxu0 0
  %144 = vmatpush1.bf16.msra.mxu0 %v102
  %145 = vmatprep.subr.bf16.mxu0 0
  %146 = vmatpush2.bf16.msra.mxu0 0
  %147 = vmatprep.subr.bf16.mxu0 0
  %148 = vmatpush2.bf16.msra.mxu0 0
  %149 = vmatprep.subr.bf16.mxu0 0
  %150 = vmatpush2.bf16.msra.mxu0 0
  %151 = vmatprep.subr.bf16.mxu0 0
  %152 = vmatpush2.bf16.msra.mxu0 0
  %153 = vmatprep.subr.bf16.mxu0 0
  %154 = vmatpush2.bf16.msra.mxu0 0
  %155 = vmatprep.subr.bf16.mxu0 0
  %156 = vmatpush2.bf16.msra.mxu0 0
  %157 = vmatprep.subr.bf16.mxu0 0
  %158 = vmatpush2.bf16.msra.mxu0 0
  %159 = vmatprep.subr.bf16.mxu0 0
  %160 = vmatpush2.bf16.msra.mxu0 0
  %161 = vmatprep.mubr.bf16.mxu0 0
  %162 = vmatmul.mubr.bf16.gmra.mxu0 %v106
  %v163 = vpop.f32.mrf.mxu0
  %v164 = vadd.f32 %v56, %v163
  %v165 = vpop.f32.mrf.mxu0
  %v166 = vpop.f32.mrf.mxu0
  %v167 = vadd.f32 %v56, %v166
  %v168 = vpop.f32.mrf.mxu0
  %169 = vmatprep.mubr.bf16.mxu0 0
  %170 = vmatmul.mubr.bf16.gmra.mxu0 %v109
  %v171 = vpop.f32.mrf.mxu0
  %v172 = vadd.f32 %v56, %v171
  %v173 = vpop.f32.mrf.mxu0
  %v174 = vpop.f32.mrf.mxu0
  %v175 = vadd.f32 %v56, %v174
  %v176 = vpop.f32.mrf.mxu0
  %177 = vmatprep.mubr.bf16.mxu0 0
  %178 = vmatmul.mubr.bf16.gmra.mxu0 %v112
  %v179 = vpop.f32.mrf.mxu0
  %v180 = vadd.f32 %v56, %v179
  %v181 = vpop.f32.mrf.mxu0
  %v182 = vpop.f32.mrf.mxu0
  %v183 = vadd.f32 %v56, %v182
  %v184 = vpop.f32.mrf.mxu0
  %185 = vmatprep.mubr.bf16.mxu0 0
  %186 = vmatmul.mubr.bf16.gmra.mxu0 %v115
  %v187 = vpop.f32.mrf.mxu0
  %v188 = vadd.f32 %v56, %v187
  %v189 = vpop.f32.mrf.mxu0
  %v190 = vpop.f32.mrf.mxu0
  %v191 = vadd.f32 %v56, %v190
  %v192 = vpop.f32.mrf.mxu0
  %193 = vmatprep.mubr.bf16.mxu0 0
  %194 = vmatmul.mubr.bf16.gmra.mxu0 %v118
  %v195 = vpop.f32.mrf.mxu0
  %v196 = vadd.f32 %v56, %v195
  %v197 = vpop.f32.mrf.mxu0
  %v198 = vpop.f32.mrf.mxu0
  %v199 = vadd.f32 %v56, %v198
  %v200 = vpop.f32.mrf.mxu0
  %201 = vmatprep.mubr.bf16.mxu0 0
  %202 = vmatmul.mubr.bf16.gmra.mxu0 %v121
  %v203 = vpop.f32.mrf.mxu0
  %v204 = vadd.f32 %v56, %v203
  %v205 = vpop.f32.mrf.mxu0
  %v206 = vpop.f32.mrf.mxu0
  %v207 = vadd.f32 %v56, %v206
  %v208 = vpop.f32.mrf.mxu0
  %209 = vmatprep.mubr.bf16.mxu0 0
  %210 = vmatmul.mubr.bf16.gmra.mxu0 %v124
  %v211 = vpop.f32.mrf.mxu0
  %v212 = vadd.f32 %v56, %v211
  %v213 = vpop.f32.mrf.mxu0
  %v214 = vpop.f32.mrf.mxu0
  %v215 = vadd.f32 %v56, %v214
  %v216 = vpop.f32.mrf.mxu0
  %217 = vmatprep.mubr.bf16.mxu0 0
  %218 = vmatmul.mubr.bf16.gmra.mxu0 %v127
  %v219 = vpop.f32.mrf.mxu0
  %v220 = vadd.f32 %v56, %v219
  %v221 = vpop.f32.mrf.mxu0
  %v222 = vpop.f32.mrf.mxu0
  %v223 = vadd.f32 %v56, %v222
  %v224 = vpop.f32.mrf.mxu0
  %225 = vdwg.mxu0
  %226 = vst [vmem:[#allocation2] sm:$0xff] %v164
  %227 = vst [vmem:[#allocation2 + $0x8] sm:$0xff] %v167
  %228 = vst [vmem:[#allocation2 + $0x10] sm:$0xff] %v172
  %229 = vst [vmem:[#allocation2 + $0x18] sm:$0xff] %v175
  %230 = vst [vmem:[#allocation2 + $0x20] sm:$0xff] %v180
  %231 = vst [vmem:[#allocation2 + $0x28] sm:$0xff] %v183
  %232 = vst [vmem:[#allocation2 + $0x30] sm:$0xff] %v188
  %233 = vst [vmem:[#allocation2 + $0x38] sm:$0xff] %v191
  %234 = vst [vmem:[#allocation2 + $0x40] sm:$0xff] %v196
  %235 = vst [vmem:[#allocation2 + $0x48] sm:$0xff] %v199
  %236 = vst [vmem:[#allocation2 + $0x50] sm:$0xff] %v204
  %237 = vst [vmem:[#allocation2 + $0x58] sm:$0xff] %v207
  %238 = vst [vmem:[#allocation2 + $0x60] sm:$0xff] %v212
  %239 = vst [vmem:[#allocation2 + $0x68] sm:$0xff] %v215
  %240 = vst [vmem:[#allocation2 + $0x70] sm:$0xff] %v220
  %241 = vst [vmem:[#allocation2 + $0x78] sm:$0xff] %v223
  %v242 = vld [vmem:[%s2] sm:$0xf]
  %v243 = vld [vmem:[%s2 + $0x4] sm:$0xf]
  %v244 = vld [vmem:[%s2 + $0x8] sm:$0xf]
  %v245 = vld [vmem:[%s2 + $0xc] sm:$0xf]
  %v246 = vld [vmem:[#allocation2] sm:$0xff]
  %v247 = vld [vmem:[#allocation2 + $0x8] sm:$0xff]
  %v252 = vunpack.c.l.b16 %v242
  %v253 = vunpack.c.l.b16 %v243
  %v254 = vunpack.c.l.b16 %v244
  %v255 = vunpack.c.l.b16 %v245
  %v256 = vpack.c.b16 %v253, %v252
  %v257 = vpack.c.b16 %v255, %v254
  %vm260 = vcmask 261120
  %v262 = vsel %vm260, 0, 0
  %264 = vmatprep.subr.bf16.mxu0 0
  %265 = vmatpush1.bf16.msra.mxu0 0
  %266 = vmatprep.subr.bf16.mxu0 0
  %267 = vmatpush1.bf16.msra.mxu0 0
  %268 = vmatprep.subr.bf16.mxu0 0
  %269 = vmatpush1.bf16.msra.mxu0 0
  %270 = vmatprep.subr.bf16.mxu0 0
  %271 = vmatpush1.bf16.msra.mxu0 0
  %272 = vmatprep.subr.bf16.mxu0 0
  %273 = vmatpush1.bf16.msra.mxu0 0
  %274 = vmatprep.subr.bf16.mxu0 0
  %275 = vmatpush1.bf16.msra.mxu0 0
  %276 = vmatprep.subr.bf16.mxu0 0
  %277 = vmatpush1.bf16.msra.mxu0 %v257
  %278 = vmatprep.subr.bf16.mxu0 0
  %279 = vmatpush1.bf16.msra.mxu0 %v256
  %280 = vmatprep.subr.bf16.mxu0 0
  %281 = vmatpush2.bf16.msra.mxu0 0
  %282 = vmatprep.subr.bf16.mxu0 0
  %283 = vmatpush2.bf16.msra.mxu0 0
  %284 = vmatprep.subr.bf16.mxu0 0
  %285 = vmatpush2.bf16.msra.mxu0 0
  %286 = vmatprep.subr.bf16.mxu0 0
  %287 = vmatpush2.bf16.msra.mxu0 0
  %288 = vmatprep.subr.bf16.mxu0 0
  %289 = vmatpush2.bf16.msra.mxu0 0
  %290 = vmatprep.subr.bf16.mxu0 0
  %291 = vmatpush2.bf16.msra.mxu0 0
  %292 = vmatprep.subr.bf16.mxu0 0
  %293 = vmatpush2.bf16.msra.mxu0 0
  %294 = vmatprep.subr.bf16.mxu0 0
  %295 = vmatpush2.bf16.msra.mxu0 0
  %296 = vmatprep.mubr.bf16.mxu0 0
  %297 = vmatmul.mubr.bf16.gmra.mxu0 %v262
  %v298 = vpop.f32.mrf.mxu0
  %v299 = vadd.f32 0.0, %v298
  %v300 = vpop.f32.mrf.mxu0
  %v301 = vpop.f32.mrf.mxu0
  %v302 = vadd.f32 0.0, %v301
  %v303 = vpop.f32.mrf.mxu0
  %304 = vdwg.mxu0
  %v305 = vadd.f32 %v246, %v299
  %v306 = vadd.f32 %v247, %v302
  %v307 = vxor.u32 %v305, 2147483648
  %v308 = vxor.u32 %v306, 2147483648
  %v309 = vmul.f32 %v307, 1.442695
  %v310 = vpow.pop %v309
  %v311 = vmul.f32 %v308, 1.442695
  %v312 = vpow.pop %v311
  %v313 = vadd.f32 %v310, 1.0
  %v314 = vadd.f32 %v312, 1.0
  %v315 = vrcp.pop %v313
  %v316 = vmul.f32 1.0, %v315
  %v317 = vrcp.pop %v314
  %v318 = vmul.f32 1.0, %v317
  %v319 = vtanh.pop %v305
  %v320 = vtanh.pop %v306
  %v321 = vmul.f32 %v316, 0.0
  %v322 = vmul.f32 %v318, 0.0
  %325 = vrot.lane.b32.xlu0 %v319, 32
  %v326 = vpop.permute.xlu0 %325
  %327 = vrot.lane.b32.xlu0 %v320, 32
  %v328 = vpop.permute.xlu0 %327
  %v331 = vmul.f32 %v316, %v326
  %v332 = vmul.f32 %v318, %v328
  %335 = vrot.lane.b32.xlu0 %v331, 32
  %v336 = vpop.permute.xlu0 %335
  %337 = vrot.lane.b32.xlu0 %v332, 32
  %v338 = vpop.permute.xlu0 %337
  %v341 = vadd.f32 %v321, %v336
  %v342 = vadd.f32 %v322, %v338
  %v343 = vtanh.pop %v341
  %v344 = vtanh.pop %v342
  %347 = vrot.lane.b32.xlu0 %v343, 32
  %v348 = vpop.permute.xlu0 %347
  %349 = vrot.lane.b32.xlu0 %v344, 32
  %v350 = vpop.permute.xlu0 %349
  %v353 = vmul.f32 %v316, %v348
  %v354 = vmul.f32 %v318, %v350
  %v355 = vpack.c.bf16 %v354, %v353
  %v357 = vunpack.c.l.b16 %v355
  %v358 = vunpack.c.h.b16 %v355
  %v359 = vpack.c.b16 %v357, %v357
  %v360 = vpack.c.b16 %v358, %v358
  %361 = vrot.lane.b32.xlu0 %v359, 64
  %v362 = vpop.permute.xlu0 %361
  %363 = vrot.lane.b32.xlu0 %v360, 64
  %v364 = vpop.permute.xlu0 %363
  %vm367 = vcmask 257024
  %368 = vst.msk [vmem:[#allocation3] sm:$0xf] %vm367, %v362
  %369 = vst.msk [vmem:[#allocation3 + $0x4] sm:$0xf] %vm367, %v364
  %s370 = scalar_lea.vmem [#allocation2], 16
  %v371 = vld [vmem:[%s370] sm:$0xff]
  %v372 = vld [vmem:[%s370 + $0x8] sm:$0xff]
  %373 = vrot.lane.b32.xlu0 %v355, 64
  %v374 = vpop.permute.xlu0 %373
  %v376 = vsel %vm260, %v374, 0
  %378 = vmatprep.subr.bf16.mxu0 0
  %379 = vmatpush1.bf16.msra.mxu0 0
  %380 = vmatprep.subr.bf16.mxu0 0
  %381 = vmatpush1.bf16.msra.mxu0 0
  %382 = vmatprep.subr.bf16.mxu0 0
  %383 = vmatpush1.bf16.msra.mxu0 0
  %384 = vmatprep.subr.bf16.mxu0 0
  %385 = vmatpush1.bf16.msra.mxu0 0
  %386 = vmatprep.subr.bf16.mxu0 0
  %387 = vmatpush1.bf16.msra.mxu0 0
  %388 = vmatprep.subr.bf16.mxu0 0
  %389 = vmatpush1.bf16.msra.mxu0 0
  %390 = vmatprep.subr.bf16.mxu0 0
  %391 = vmatpush1.bf16.msra.mxu0 %v257
  %392 = vmatprep.subr.bf16.mxu0 0
  %393 = vmatpush1.bf16.msra.mxu0 %v256
  %394 = vmatprep.subr.bf16.mxu0 0
  %395 = vmatpush2.bf16.msra.mxu0 0
  %396 = vmatprep.subr.bf16.mxu0 0
  %397 = vmatpush2.bf16.msra.mxu0 0
  %398 = vmatprep.subr.bf16.mxu0 0
  %399 = vmatpush2.bf16.msra.mxu0 0
  %400 = vmatprep.subr.bf16.mxu0 0
  %401 = vmatpush2.bf16.msra.mxu0 0
  %402 = vmatprep.subr.bf16.mxu0 0
  %403 = vmatpush2.bf16.msra.mxu0 0
  %404 = vmatprep.subr.bf16.mxu0 0
  %405 = vmatpush2.bf16.msra.mxu0 0
  %406 = vmatprep.subr.bf16.mxu0 0
  %407 = vmatpush2.bf16.msra.mxu0 0
  %408 = vmatprep.subr.bf16.mxu0 0
  %409 = vmatpush2.bf16.msra.mxu0 0
  %410 = vmatprep.mubr.bf16.mxu0 0
  %411 = vmatmul.mubr.bf16.gmra.mxu0 %v376
  %v412 = vpop.f32.mrf.mxu0
  %v413 = vadd.f32 0.0, %v412
  %v414 = vpop.f32.mrf.mxu0
  %v415 = vpop.f32.mrf.mxu0
  %v416 = vadd.f32 0.0, %v415
  %v417 = vpop.f32.mrf.mxu0
  %418 = vdwg.mxu0
  %v419 = vadd.f32 %v371, %v413
  %v420 = vadd.f32 %v372, %v416
  %v421 = vxor.u32 %v419, 2147483648
  %v422 = vxor.u32 %v420, 2147483648
  %v423 = vmul.f32 %v421, 1.442695
  %v424 = vpow.pop %v423
  %v425 = vmul.f32 %v422, 1.442695
  %v426 = vpow.pop %v425
  %v427 = vadd.f32 %v424, 1.0
  %v428 = vadd.f32 %v426, 1.0
  %v429 = vrcp.pop %v427
  %v430 = vmul.f32 1.0, %v429
  %v431 = vrcp.pop %v428
  %v432 = vmul.f32 1.0, %v431
  %v433 = vtanh.pop %v419
  %v434 = vtanh.pop %v420
  %v435 = vmul.f32 %v430, %v341
  %v436 = vmul.f32 %v432, %v342
  %439 = vrot.lane.b32.xlu0 %v433, 32
  %v440 = vpop.permute.xlu0 %439
  %441 = vrot.lane.b32.xlu0 %v434, 32
  %v442 = vpop.permute.xlu0 %441
  %v445 = vmul.f32 %v430, %v440
  %v446 = vmul.f32 %v432, %v442
  %449 = vrot.lane.b32.xlu0 %v445, 32
  %v450 = vpop.permute.xlu0 %449
  %451 = vrot.lane.b32.xlu0 %v446, 32
  %v452 = vpop.permute.xlu0 %451
  %v455 = vadd.f32 %v435, %v450
  %v456 = vadd.f32 %v436, %v452
  %v457 = vtanh.pop %v455
  %v458 = vtanh.pop %v456
  %461 = vrot.lane.b32.xlu0 %v457, 32
  %v462 = vpop.permute.xlu0 %461
  %463 = vrot.lane.b32.xlu0 %v458, 32
  %v464 = vpop.permute.xlu0 %463
  %v467 = vmul.f32 %v430, %v462
  %v468 = vmul.f32 %v432, %v464
  %v469 = vpack.c.bf16 %v468, %v467
  %v471 = vunpack.c.l.b16 %v469
  %v472 = vunpack.c.h.b16 %v469
  %v473 = vpack.c.b16 %v471, %v471
  %v474 = vpack.c.b16 %v472, %v472
  %475 = vrot.lane.b32.xlu0 %v473, 64
  %v476 = vpop.permute.xlu0 %475
  %477 = vrot.lane.b32.xlu0 %v474, 64
  %v478 = vpop.permute.xlu0 %477
  %s481 = scalar_lea.vmem [#allocation3], 8
  %482 = vst.msk [vmem:[%s481] sm:$0xf] %vm367, %v476
  %483 = vst.msk [vmem:[%s481 + $0x4] sm:$0xf] %vm367, %v478
  %s484 = scalar_lea.vmem [#allocation2], 32
  %v485 = vld [vmem:[%s484] sm:$0xff]
  %v486 = vld [vmem:[%s484 + $0x8] sm:$0xff]
  %487 = vrot.lane.b32.xlu0 %v469, 64
  %v488 = vpop.permute.xlu0 %487
  %v490 = vsel %vm260, %v488, 0
  %492 = vmatprep.subr.bf16.mxu0 0
  %493 = vmatpush1.bf16.msra.mxu0 0
  %494 = vmatprep.subr.bf16.mxu0 0
  %495 = vmatpush1.bf16.msra.mxu0 0
  %496 = vmatprep.subr.bf16.mxu0 0
  %497 = vmatpush1.bf16.msra.mxu0 0
  %498 = vmatprep.subr.bf16.mxu0 0
  %499 = vmatpush1.bf16.msra.mxu0 0
  %500 = vmatprep.subr.bf16.mxu0 0
  %501 = vmatpush1.bf16.msra.mxu0 0
  %502 = vmatprep.subr.bf16.mxu0 0
  %503 = vmatpush1.bf16.msra.mxu0 0
  %504 = vmatprep.subr.bf16.mxu0 0
  %505 = vmatpush1.bf16.msra.mxu0 %v257
  %506 = vmatprep.subr.bf16.mxu0 0
  %507 = vmatpush1.bf16.msra.mxu0 %v256
  %508 = vmatprep.subr.bf16.mxu0 0
  %509 = vmatpush2.bf16.msra.mxu0 0
  %510 = vmatprep.subr.bf16.mxu0 0
  %511 = vmatpush2.bf16.msra.mxu0 0
  %512 = vmatprep.subr.bf16.mxu0 0
  %513 = vmatpush2.bf16.msra.mxu0 0
  %514 = vmatprep.subr.bf16.mxu0 0
  %515 = vmatpush2.bf16.msra.mxu0 0
  %516 = vmatprep.subr.bf16.mxu0 0
  %517 = vmatpush2.bf16.msra.mxu0 0
  %518 = vmatprep.subr.bf16.mxu0 0
  %519 = vmatpush2.bf16.msra.mxu0 0
  %520 = vmatprep.subr.bf16.mxu0 0
  %521 = vmatpush2.bf16.msra.mxu0 0
  %522 = vmatprep.subr.bf16.mxu0 0
  %523 = vmatpush2.bf16.msra.mxu0 0
  %524 = vmatprep.mubr.bf16.mxu0 0
  %525 = vmatmul.mubr.bf16.gmra.mxu0 %v490
  %v526 = vpop.f32.mrf.mxu0
  %v527 = vadd.f32 0.0, %v526
  %v528 = vpop.f32.mrf.mxu0
  %v529 = vpop.f32.mrf.mxu0
  %v530 = vadd.f32 0.0, %v529
  %v531 = vpop.f32.mrf.mxu0
  %532 = vdwg.mxu0
  %v533 = vadd.f32 %v485, %v527
  %v534 = vadd.f32 %v486, %v530
  %v535 = vxor.u32 %v533, 2147483648
  %v536 = vxor.u32 %v534, 2147483648
  %v537 = vmul.f32 %v535, 1.442695
  %v538 = vpow.pop %v537
  %v539 = vmul.f32 %v536, 1.442695
  %v540 = vpow.pop %v539
  %v541 = vadd.f32 %v538, 1.0
  %v542 = vadd.f32 %v540, 1.0
  %v543 = vrcp.pop %v541
  %v544 = vmul.f32 1.0, %v543
  %v545 = vrcp.pop %v542
  %v546 = vmul.f32 1.0, %v545
  %v547 = vtanh.pop %v533
  %v548 = vtanh.pop %v534
  %v549 = vmul.f32 %v544, %v455
  %v550 = vmul.f32 %v546, %v456
  %553 = vrot.lane.b32.xlu0 %v547, 32
  %v554 = vpop.permute.xlu0 %553
  %555 = vrot.lane.b32.xlu0 %v548, 32
  %v556 = vpop.permute.xlu0 %555
  %v559 = vmul.f32 %v544, %v554
  %v560 = vmul.f32 %v546, %v556
  %563 = vrot.lane.b32.xlu0 %v559, 32
  %v564 = vpop.permute.xlu0 %563
  %565 = vrot.lane.b32.xlu0 %v560, 32
  %v566 = vpop.permute.xlu0 %565
  %v569 = vadd.f32 %v549, %v564
  %v570 = vadd.f32 %v550, %v566
  %v571 = vtanh.pop %v569
  %v572 = vtanh.pop %v570
  %575 = vrot.lane.b32.xlu0 %v571, 32
  %v576 = vpop.permute.xlu0 %575
  %577 = vrot.lane.b32.xlu0 %v572, 32
  %v578 = vpop.permute.xlu0 %577
  %v581 = vmul.f32 %v544, %v576
  %v582 = vmul.f32 %v546, %v578
  %v583 = vpack.c.bf16 %v582, %v581
  %v585 = vunpack.c.l.b16 %v583
  %v586 = vunpack.c.h.b16 %v583
  %v587 = vpack.c.b16 %v585, %v585
  %v588 = vpack.c.b16 %v586, %v586
  %589 = vrot.lane.b32.xlu0 %v587, 64
  %v590 = vpop.permute.xlu0 %589
  %591 = vrot.lane.b32.xlu0 %v588, 64
  %v592 = vpop.permute.xlu0 %591
  %s595 = scalar_lea.vmem [#allocation3], 16
  %596 = vst.msk [vmem:[%s595] sm:$0xf] %vm367, %v590
  %597 = vst.msk [vmem:[%s595 + $0x4] sm:$0xf] %vm367, %v592
  %s598 = scalar_lea.vmem [#allocation2], 48
  %v599 = vld [vmem:[%s598] sm:$0xff]
  %v600 = vld [vmem:[%s598 + $0x8] sm:$0xff]
  %601 = vrot.lane.b32.xlu0 %v583, 64
  %v602 = vpop.permute.xlu0 %601
  %v604 = vsel %vm260, %v602, 0
  %606 = vmatprep.subr.bf16.mxu0 0
  %607 = vmatpush1.bf16.msra.mxu0 0
  %608 = vmatprep.subr.bf16.mxu0 0
  %609 = vmatpush1.bf16.msra.mxu0 0
  %610 = vmatprep.subr.bf16.mxu0 0
  %611 = vmatpush1.bf16.msra.mxu0 0
  %612 = vmatprep.subr.bf16.mxu0 0
  %613 = vmatpush1.bf16.msra.mxu0 0
  %614 = vmatprep.subr.bf16.mxu0 0
  %615 = vmatpush1.bf16.msra.mxu0 0
  %616 = vmatprep.subr.bf16.mxu0 0
  %617 = vmatpush1.bf16.msra.mxu0 0
  %618 = vmatprep.subr.bf16.mxu0 0
  %619 = vmatpush1.bf16.msra.mxu0 %v257
  %620 = vmatprep.subr.bf16.mxu0 0
  %621 = vmatpush1.bf16.msra.mxu0 %v256
  %622 = vmatprep.subr.bf16.mxu0 0
  %623 = vmatpush2.bf16.msra.mxu0 0
  %624 = vmatprep.subr.bf16.mxu0 0
  %625 = vmatpush2.bf16.msra.mxu0 0
  %626 = vmatprep.subr.bf16.mxu0 0
  %627 = vmatpush2.bf16.msra.mxu0 0
  %628 = vmatprep.subr.bf16.mxu0 0
  %629 = vmatpush2.bf16.msra.mxu0 0
  %630 = vmatprep.subr.bf16.mxu0 0
  %631 = vmatpush2.bf16.msra.mxu0 0
  %632 = vmatprep.subr.bf16.mxu0 0
  %633 = vmatpush2.bf16.msra.mxu0 0
  %634 = vmatprep.subr.bf16.mxu0 0
  %635 = vmatpush2.bf16.msra.mxu0 0
  %636 = vmatprep.subr.bf16.mxu0 0
  %637 = vmatpush2.bf16.msra.mxu0 0
  %638 = vmatprep.mubr.bf16.mxu0 0
  %639 = vmatmul.mubr.bf16.gmra.mxu0 %v604
  %v640 = vpop.f32.mrf.mxu0
  %v641 = vadd.f32 0.0, %v640
  %v642 = vpop.f32.mrf.mxu0
  %v643 = vpop.f32.mrf.mxu0
  %v644 = vadd.f32 0.0, %v643
  %v645 = vpop.f32.mrf.mxu0
  %646 = vdwg.mxu0
  %v647 = vadd.f32 %v599, %v641
  %v648 = vadd.f32 %v600, %v644
  %v649 = vxor.u32 %v647, 2147483648
  %v650 = vxor.u32 %v648, 2147483648
  %v651 = vmul.f32 %v649, 1.442695
  %v652 = vpow.pop %v651
  %v653 = vmul.f32 %v650, 1.442695
  %v654 = vpow.pop %v653
  %v655 = vadd.f32 %v652, 1.0
  %v656 = vadd.f32 %v654, 1.0
  %v657 = vrcp.pop %v655
  %v658 = vmul.f32 1.0, %v657
  %v659 = vrcp.pop %v656
  %v660 = vmul.f32 1.0, %v659
  %v661 = vtanh.pop %v647
  %v662 = vtanh.pop %v648
  %v663 = vmul.f32 %v658, %v569
  %v664 = vmul.f32 %v660, %v570
  %667 = vrot.lane.b32.xlu0 %v661, 32
  %v668 = vpop.permute.xlu0 %667
  %669 = vrot.lane.b32.xlu0 %v662, 32
  %v670 = vpop.permute.xlu0 %669
  %v673 = vmul.f32 %v658, %v668
  %v674 = vmul.f32 %v660, %v670
  %677 = vrot.lane.b32.xlu0 %v673, 32
  %v678 = vpop.permute.xlu0 %677
  %679 = vrot.lane.b32.xlu0 %v674, 32
  %v680 = vpop.permute.xlu0 %679
  %v683 = vadd.f32 %v663, %v678
  %v684 = vadd.f32 %v664, %v680
  %v685 = vtanh.pop %v683
  %v686 = vtanh.pop %v684
  %689 = vrot.lane.b32.xlu0 %v685, 32
  %v690 = vpop.permute.xlu0 %689
  %691 = vrot.lane.b32.xlu0 %v686, 32
  %v692 = vpop.permute.xlu0 %691
  %v695 = vmul.f32 %v658, %v690
  %v696 = vmul.f32 %v660, %v692
  %v697 = vpack.c.bf16 %v696, %v695
  %v699 = vunpack.c.l.b16 %v697
  %v700 = vunpack.c.h.b16 %v697
  %v701 = vpack.c.b16 %v699, %v699
  %v702 = vpack.c.b16 %v700, %v700
  %703 = vrot.lane.b32.xlu0 %v701, 64
  %v704 = vpop.permute.xlu0 %703
  %705 = vrot.lane.b32.xlu0 %v702, 64
  %v706 = vpop.permute.xlu0 %705
  %s709 = scalar_lea.vmem [#allocation3], 24
  %710 = vst.msk [vmem:[%s709] sm:$0xf] %vm367, %v704
  %711 = vst.msk [vmem:[%s709 + $0x4] sm:$0xf] %vm367, %v706
  %s712 = scalar_lea.vmem [#allocation2], 64
  %v713 = vld [vmem:[%s712] sm:$0xff]
  %v714 = vld [vmem:[%s712 + $0x8] sm:$0xff]
  %715 = vrot.lane.b32.xlu0 %v697, 64
  %v716 = vpop.permute.xlu0 %715
  %v718 = vsel %vm260, %v716, 0
  %720 = vmatprep.subr.bf16.mxu0 0
  %721 = vmatpush1.bf16.msra.mxu0 0
  %722 = vmatprep.subr.bf16.mxu0 0
  %723 = vmatpush1.bf16.msra.mxu0 0
  %724 = vmatprep.subr.bf16.mxu0 0
  %725 = vmatpush1.bf16.msra.mxu0 0
  %726 = vmatprep.subr.bf16.mxu0 0
  %727 = vmatpush1.bf16.msra.mxu0 0
  %728 = vmatprep.subr.bf16.mxu0 0
  %729 = vmatpush1.bf16.msra.mxu0 0
  %730 = vmatprep.subr.bf16.mxu0 0
  %731 = vmatpush1.bf16.msra.mxu0 0
  %732 = vmatprep.subr.bf16.mxu0 0
  %733 = vmatpush1.bf16.msra.mxu0 %v257
  %734 = vmatprep.subr.bf16.mxu0 0
  %735 = vmatpush1.bf16.msra.mxu0 %v256
  %736 = vmatprep.subr.bf16.mxu0 0
  %737 = vmatpush2.bf16.msra.mxu0 0
  %738 = vmatprep.subr.bf16.mxu0 0
  %739 = vmatpush2.bf16.msra.mxu0 0
  %740 = vmatprep.subr.bf16.mxu0 0
  %741 = vmatpush2.bf16.msra.mxu0 0
  %742 = vmatprep.subr.bf16.mxu0 0
  %743 = vmatpush2.bf16.msra.mxu0 0
  %744 = vmatprep.subr.bf16.mxu0 0
  %745 = vmatpush2.bf16.msra.mxu0 0
  %746 = vmatprep.subr.bf16.mxu0 0
  %747 = vmatpush2.bf16.msra.mxu0 0
  %748 = vmatprep.subr.bf16.mxu0 0
  %749 = vmatpush2.bf16.msra.mxu0 0
  %750 = vmatprep.subr.bf16.mxu0 0
  %751 = vmatpush2.bf16.msra.mxu0 0
  %752 = vmatprep.mubr.bf16.mxu0 0
  %753 = vmatmul.mubr.bf16.gmra.mxu0 %v718
  %v754 = vpop.f32.mrf.mxu0
  %v755 = vadd.f32 0.0, %v754
  %v756 = vpop.f32.mrf.mxu0
  %v757 = vpop.f32.mrf.mxu0
  %v758 = vadd.f32 0.0, %v757
  %v759 = vpop.f32.mrf.mxu0
  %760 = vdwg.mxu0
  %v761 = vadd.f32 %v713, %v755
  %v762 = vadd.f32 %v714, %v758
  %v763 = vxor.u32 %v761, 2147483648
  %v764 = vxor.u32 %v762, 2147483648
  %v765 = vmul.f32 %v763, 1.442695
  %v766 = vpow.pop %v765
  %v767 = vmul.f32 %v764, 1.442695
  %v768 = vpow.pop %v767
  %v769 = vadd.f32 %v766, 1.0
  %v770 = vadd.f32 %v768, 1.0
  %v771 = vrcp.pop %v769
  %v772 = vmul.f32 1.0, %v771
  %v773 = vrcp.pop %v770
  %v774 = vmul.f32 1.0, %v773
  %v775 = vtanh.pop %v761
  %v776 = vtanh.pop %v762
  %v777 = vmul.f32 %v772, %v683
  %v778 = vmul.f32 %v774, %v684
  %781 = vrot.lane.b32.xlu0 %v775, 32
  %v782 = vpop.permute.xlu0 %781
  %783 = vrot.lane.b32.xlu0 %v776, 32
  %v784 = vpop.permute.xlu0 %783
  %v787 = vmul.f32 %v772, %v782
  %v788 = vmul.f32 %v774, %v784
  %791 = vrot.lane.b32.xlu0 %v787, 32
  %v792 = vpop.permute.xlu0 %791
  %793 = vrot.lane.b32.xlu0 %v788, 32
  %v794 = vpop.permute.xlu0 %793
  %v797 = vadd.f32 %v777, %v792
  %v798 = vadd.f32 %v778, %v794
  %v799 = vtanh.pop %v797
  %v800 = vtanh.pop %v798
  %803 = vrot.lane.b32.xlu0 %v799, 32
  %v804 = vpop.permute.xlu0 %803
  %805 = vrot.lane.b32.xlu0 %v800, 32
  %v806 = vpop.permute.xlu0 %805
  %v809 = vmul.f32 %v772, %v804
  %v810 = vmul.f32 %v774, %v806
  %v811 = vpack.c.bf16 %v810, %v809
  %v813 = vunpack.c.l.b16 %v811
  %v814 = vunpack.c.h.b16 %v811
  %v815 = vpack.c.b16 %v813, %v813
  %v816 = vpack.c.b16 %v814, %v814
  %817 = vrot.lane.b32.xlu0 %v815, 64
  %v818 = vpop.permute.xlu0 %817
  %819 = vrot.lane.b32.xlu0 %v816, 64
  %v820 = vpop.permute.xlu0 %819
  %s823 = scalar_lea.vmem [#allocation3], 32
  %824 = vst.msk [vmem:[%s823] sm:$0xf] %vm367, %v818
  %825 = vst.msk [vmem:[%s823 + $0x4] sm:$0xf] %vm367, %v820
  %s826 = scalar_lea.vmem [#allocation2], 80
  %v827 = vld [vmem:[%s826] sm:$0xff]
  %v828 = vld [vmem:[%s826 + $0x8] sm:$0xff]
  %829 = vrot.lane.b32.xlu0 %v811, 64
  %v830 = vpop.permute.xlu0 %829
  %v832 = vsel %vm260, %v830, 0
  %834 = vmatprep.subr.bf16.mxu0 0
  %835 = vmatpush1.bf16.msra.mxu0 0
  %836 = vmatprep.subr.bf16.mxu0 0
  %837 = vmatpush1.bf16.msra.mxu0 0
  %838 = vmatprep.subr.bf16.mxu0 0
  %839 = vmatpush1.bf16.msra.mxu0 0
  %840 = vmatprep.subr.bf16.mxu0 0
  %841 = vmatpush1.bf16.msra.mxu0 0
  %842 = vmatprep.subr.bf16.mxu0 0
  %843 = vmatpush1.bf16.msra.mxu0 0
  %844 = vmatprep.subr.bf16.mxu0 0
  %845 = vmatpush1.bf16.msra.mxu0 0
  %846 = vmatprep.subr.bf16.mxu0 0
  %847 = vmatpush1.bf16.msra.mxu0 %v257
  %848 = vmatprep.subr.bf16.mxu0 0
  %849 = vmatpush1.bf16.msra.mxu0 %v256
  %850 = vmatprep.subr.bf16.mxu0 0
  %851 = vmatpush2.bf16.msra.mxu0 0
  %852 = vmatprep.subr.bf16.mxu0 0
  %853 = vmatpush2.bf16.msra.mxu0 0
  %854 = vmatprep.subr.bf16.mxu0 0
  %855 = vmatpush2.bf16.msra.mxu0 0
  %856 = vmatprep.subr.bf16.mxu0 0
  %857 = vmatpush2.bf16.msra.mxu0 0
  %858 = vmatprep.subr.bf16.mxu0 0
  %859 = vmatpush2.bf16.msra.mxu0 0
  %860 = vmatprep.subr.bf16.mxu0 0
  %861 = vmatpush2.bf16.msra.mxu0 0
  %862 = vmatprep.subr.bf16.mxu0 0
  %863 = vmatpush2.bf16.msra.mxu0 0
  %864 = vmatprep.subr.bf16.mxu0 0
  %865 = vmatpush2.bf16.msra.mxu0 0
  %866 = vmatprep.mubr.bf16.mxu0 0
  %867 = vmatmul.mubr.bf16.gmra.mxu0 %v832
  %v868 = vpop.f32.mrf.mxu0
  %v869 = vadd.f32 0.0, %v868
  %v870 = vpop.f32.mrf.mxu0
  %v871 = vpop.f32.mrf.mxu0
  %v872 = vadd.f32 0.0, %v871
  %v873 = vpop.f32.mrf.mxu0
  %874 = vdwg.mxu0
  %v875 = vadd.f32 %v827, %v869
  %v876 = vadd.f32 %v828, %v872
  %v877 = vxor.u32 %v875, 2147483648
  %v878 = vxor.u32 %v876, 2147483648
  %v879 = vmul.f32 %v877, 1.442695
  %v880 = vpow.pop %v879
  %v881 = vmul.f32 %v878, 1.442695
  %v882 = vpow.pop %v881
  %v883 = vadd.f32 %v880, 1.0
  %v884 = vadd.f32 %v882, 1.0
  %v885 = vrcp.pop %v883
  %v886 = vmul.f32 1.0, %v885
  %v887 = vrcp.pop %v884
  %v888 = vmul.f32 1.0, %v887
  %v889 = vtanh.pop %v875
  %v890 = vtanh.pop %v876
  %v891 = vmul.f32 %v886, %v797
  %v892 = vmul.f32 %v888, %v798
  %895 = vrot.lane.b32.xlu0 %v889, 32
  %v896 = vpop.permute.xlu0 %895
  %897 = vrot.lane.b32.xlu0 %v890, 32
  %v898 = vpop.permute.xlu0 %897
  %v901 = vmul.f32 %v886, %v896
  %v902 = vmul.f32 %v888, %v898
  %905 = vrot.lane.b32.xlu0 %v901, 32
  %v906 = vpop.permute.xlu0 %905
  %907 = vrot.lane.b32.xlu0 %v902, 32
  %v908 = vpop.permute.xlu0 %907
  %v911 = vadd.f32 %v891, %v906
  %v912 = vadd.f32 %v892, %v908
  %v913 = vtanh.pop %v911
  %v914 = vtanh.pop %v912
  %917 = vrot.lane.b32.xlu0 %v913, 32
  %v918 = vpop.permute.xlu0 %917
  %919 = vrot.lane.b32.xlu0 %v914, 32
  %v920 = vpop.permute.xlu0 %919
  %v923 = vmul.f32 %v886, %v918
  %v924 = vmul.f32 %v888, %v920
  %v925 = vpack.c.bf16 %v924, %v923
  %v927 = vunpack.c.l.b16 %v925
  %v928 = vunpack.c.h.b16 %v925
  %v929 = vpack.c.b16 %v927, %v927
  %v930 = vpack.c.b16 %v928, %v928
  %931 = vrot.lane.b32.xlu0 %v929, 64
  %v932 = vpop.permute.xlu0 %931
  %933 = vrot.lane.b32.xlu0 %v930, 64
  %v934 = vpop.permute.xlu0 %933
  %s937 = scalar_lea.vmem [#allocation3], 40
  %938 = vst.msk [vmem:[%s937] sm:$0xf] %vm367, %v932
  %939 = vst.msk [vmem:[%s937 + $0x4] sm:$0xf] %vm367, %v934
  %s940 = scalar_lea.vmem [#allocation2], 96
  %v941 = vld [vmem:[%s940] sm:$0xff]
  %v942 = vld [vmem:[%s940 + $0x8] sm:$0xff]
  %943 = vrot.lane.b32.xlu0 %v925, 64
  %v944 = vpop.permute.xlu0 %943
  %v946 = vsel %vm260, %v944, 0
  %948 = vmatprep.subr.bf16.mxu0 0
  %949 = vmatpush1.bf16.msra.mxu0 0
  %950 = vmatprep.subr.bf16.mxu0 0
  %951 = vmatpush1.bf16.msra.mxu0 0
  %952 = vmatprep.subr.bf16.mxu0 0
  %953 = vmatpush1.bf16.msra.mxu0 0
  %954 = vmatprep.subr.bf16.mxu0 0
  %955 = vmatpush1.bf16.msra.mxu0 0
  %956 = vmatprep.subr.bf16.mxu0 0
  %957 = vmatpush1.bf16.msra.mxu0 0
  %958 = vmatprep.subr.bf16.mxu0 0
  %959 = vmatpush1.bf16.msra.mxu0 0
  %960 = vmatprep.subr.bf16.mxu0 0
  %961 = vmatpush1.bf16.msra.mxu0 %v257
  %962 = vmatprep.subr.bf16.mxu0 0
  %963 = vmatpush1.bf16.msra.mxu0 %v256
  %964 = vmatprep.subr.bf16.mxu0 0
  %965 = vmatpush2.bf16.msra.mxu0 0
  %966 = vmatprep.subr.bf16.mxu0 0
  %967 = vmatpush2.bf16.msra.mxu0 0
  %968 = vmatprep.subr.bf16.mxu0 0
  %969 = vmatpush2.bf16.msra.mxu0 0
  %970 = vmatprep.subr.bf16.mxu0 0
  %971 = vmatpush2.bf16.msra.mxu0 0
  %972 = vmatprep.subr.bf16.mxu0 0
  %973 = vmatpush2.bf16.msra.mxu0 0
  %974 = vmatprep.subr.bf16.mxu0 0
  %975 = vmatpush2.bf16.msra.mxu0 0
  %976 = vmatprep.subr.bf16.mxu0 0
  %977 = vmatpush2.bf16.msra.mxu0 0
  %978 = vmatprep.subr.bf16.mxu0 0
  %979 = vmatpush2.bf16.msra.mxu0 0
  %980 = vmatprep.mubr.bf16.mxu0 0
  %981 = vmatmul.mubr.bf16.gmra.mxu0 %v946
  %v982 = vpop.f32.mrf.mxu0
  %v983 = vadd.f32 0.0, %v982
  %v984 = vpop.f32.mrf.mxu0
  %v985 = vpop.f32.mrf.mxu0
  %v986 = vadd.f32 0.0, %v985
  %v987 = vpop.f32.mrf.mxu0
  %988 = vdwg.mxu0
  %v989 = vadd.f32 %v941, %v983
  %v990 = vadd.f32 %v942, %v986
  %v991 = vxor.u32 %v989, 2147483648
  %v992 = vxor.u32 %v990, 2147483648
  %v993 = vmul.f32 %v991, 1.442695
  %v994 = vpow.pop %v993
  %v995 = vmul.f32 %v992, 1.442695
  %v996 = vpow.pop %v995
  %v997 = vadd.f32 %v994, 1.0
  %v998 = vadd.f32 %v996, 1.0
  %v999 = vrcp.pop %v997
  %v1000 = vmul.f32 1.0, %v999
  %v1001 = vrcp.pop %v998
  %v1002 = vmul.f32 1.0, %v1001
  %v1003 = vtanh.pop %v989
  %v1004 = vtanh.pop %v990
  %v1005 = vmul.f32 %v1000, %v911
  %v1006 = vmul.f32 %v1002, %v912
  %1009 = vrot.lane.b32.xlu0 %v1003, 32
  %v1010 = vpop.permute.xlu0 %1009
  %1011 = vrot.lane.b32.xlu0 %v1004, 32
  %v1012 = vpop.permute.xlu0 %1011
  %v1015 = vmul.f32 %v1000, %v1010
  %v1016 = vmul.f32 %v1002, %v1012
  %1019 = vrot.lane.b32.xlu0 %v1015, 32
  %v1020 = vpop.permute.xlu0 %1019
  %1021 = vrot.lane.b32.xlu0 %v1016, 32
  %v1022 = vpop.permute.xlu0 %1021
  %v1025 = vadd.f32 %v1005, %v1020
  %v1026 = vadd.f32 %v1006, %v1022
  %v1027 = vtanh.pop %v1025
  %v1028 = vtanh.pop %v1026
  %1031 = vrot.lane.b32.xlu0 %v1027, 32
  %v1032 = vpop.permute.xlu0 %1031
  %1033 = vrot.lane.b32.xlu0 %v1028, 32
  %v1034 = vpop.permute.xlu0 %1033
  %v1037 = vmul.f32 %v1000, %v1032
  %v1038 = vmul.f32 %v1002, %v1034
  %v1039 = vpack.c.bf16 %v1038, %v1037
  %v1041 = vunpack.c.l.b16 %v1039
  %v1042 = vunpack.c.h.b16 %v1039
  %v1043 = vpack.c.b16 %v1041, %v1041
  %v1044 = vpack.c.b16 %v1042, %v1042
  %1045 = vrot.lane.b32.xlu0 %v1043, 64
  %v1046 = vpop.permute.xlu0 %1045
  %1047 = vrot.lane.b32.xlu0 %v1044, 64
  %v1048 = vpop.permute.xlu0 %1047
  %s1051 = scalar_lea.vmem [#allocation3], 48
  %1052 = vst.msk [vmem:[%s1051] sm:$0xf] %vm367, %v1046
  %1053 = vst.msk [vmem:[%s1051 + $0x4] sm:$0xf] %vm367, %v1048
  %s1054 = scalar_lea.vmem [#allocation2], 112
  %v1055 = vld [vmem:[%s1054] sm:$0xff]
  %v1056 = vld [vmem:[%s1054 + $0x8] sm:$0xff]
  %1057 = vrot.lane.b32.xlu0 %v1039, 64
  %v1058 = vpop.permute.xlu0 %1057
  %v1060 = vsel %vm260, %v1058, 0
  %1062 = vmatprep.subr.bf16.mxu0 0
  %1063 = vmatpush1.bf16.msra.mxu0 0
  %1064 = vmatprep.subr.bf16.mxu0 0
  %1065 = vmatpush1.bf16.msra.mxu0 0
  %1066 = vmatprep.subr.bf16.mxu0 0
  %1067 = vmatpush1.bf16.msra.mxu0 0
  %1068 = vmatprep.subr.bf16.mxu0 0
  %1069 = vmatpush1.bf16.msra.mxu0 0
  %1070 = vmatprep.subr.bf16.mxu0 0
  %1071 = vmatpush1.bf16.msra.mxu0 0
  %1072 = vmatprep.subr.bf16.mxu0 0
  %1073 = vmatpush1.bf16.msra.mxu0 0
  %1074 = vmatprep.subr.bf16.mxu0 0
  %1075 = vmatpush1.bf16.msra.mxu0 %v257
  %1076 = vmatprep.subr.bf16.mxu0 0
  %1077 = vmatpush1.bf16.msra.mxu0 %v256
  %1078 = vmatprep.subr.bf16.mxu0 0
  %1079 = vmatpush2.bf16.msra.mxu0 0
  %1080 = vmatprep.subr.bf16.mxu0 0
  %1081 = vmatpush2.bf16.msra.mxu0 0
  %1082 = vmatprep.subr.bf16.mxu0 0
  %1083 = vmatpush2.bf16.msra.mxu0 0
  %1084 = vmatprep.subr.bf16.mxu0 0
  %1085 = vmatpush2.bf16.msra.mxu0 0
  %1086 = vmatprep.subr.bf16.mxu0 0
  %1087 = vmatpush2.bf16.msra.mxu0 0
  %1088 = vmatprep.subr.bf16.mxu0 0
  %1089 = vmatpush2.bf16.msra.mxu0 0
  %1090 = vmatprep.subr.bf16.mxu0 0
  %1091 = vmatpush2.bf16.msra.mxu0 0
  %1092 = vmatprep.subr.bf16.mxu0 0
  %1093 = vmatpush2.bf16.msra.mxu0 0
  %1094 = vmatprep.mubr.bf16.mxu0 0
  %1095 = vmatmul.mubr.bf16.gmra.mxu0 %v1060
  %v1096 = vpop.f32.mrf.mxu0
  %v1097 = vadd.f32 0.0, %v1096
  %v1098 = vpop.f32.mrf.mxu0
  %v1099 = vpop.f32.mrf.mxu0
  %v1100 = vadd.f32 0.0, %v1099
  %v1101 = vpop.f32.mrf.mxu0
  %1102 = vdwg.mxu0
  %v1103 = vadd.f32 %v1055, %v1097
  %v1104 = vadd.f32 %v1056, %v1100
  %v1105 = vxor.u32 %v1103, 2147483648
  %v1106 = vxor.u32 %v1104, 2147483648
  %v1107 = vmul.f32 %v1105, 1.442695
  %v1108 = vpow.pop %v1107
  %v1109 = vmul.f32 %v1106, 1.442695
  %v1110 = vpow.pop %v1109
  %v1111 = vadd.f32 %v1108, 1.0
  %v1112 = vadd.f32 %v1110, 1.0
  %v1113 = vrcp.pop %v1111
  %v1114 = vmul.f32 1.0, %v1113
  %v1115 = vrcp.pop %v1112
  %v1116 = vmul.f32 1.0, %v1115
  %v1117 = vtanh.pop %v1103
  %v1118 = vtanh.pop %v1104
  %v1119 = vmul.f32 %v1114, %v1025
  %v1120 = vmul.f32 %v1116, %v1026
  %1123 = vrot.lane.b32.xlu0 %v1117, 32
  %v1124 = vpop.permute.xlu0 %1123
  %1125 = vrot.lane.b32.xlu0 %v1118, 32
  %v1126 = vpop.permute.xlu0 %1125
  %v1129 = vmul.f32 %v1114, %v1124
  %v1130 = vmul.f32 %v1116, %v1126
  %1133 = vrot.lane.b32.xlu0 %v1129, 32
  %v1134 = vpop.permute.xlu0 %1133
  %1135 = vrot.lane.b32.xlu0 %v1130, 32
  %v1136 = vpop.permute.xlu0 %1135
  %v1139 = vadd.f32 %v1119, %v1134
  %v1140 = vadd.f32 %v1120, %v1136
  %v1141 = vtanh.pop %v1139
  %v1142 = vtanh.pop %v1140
  %1145 = vrot.lane.b32.xlu0 %v1141, 32
  %v1146 = vpop.permute.xlu0 %1145
  %1147 = vrot.lane.b32.xlu0 %v1142, 32
  %v1148 = vpop.permute.xlu0 %1147
  %v1151 = vmul.f32 %v1114, %v1146
  %v1152 = vmul.f32 %v1116, %v1148
  %v1153 = vpack.c.bf16 %v1152, %v1151
  %v1155 = vunpack.c.l.b16 %v1153
  %v1156 = vunpack.c.h.b16 %v1153
  %v1157 = vpack.c.b16 %v1155, %v1155
  %v1158 = vpack.c.b16 %v1156, %v1156
  %1159 = vrot.lane.b32.xlu0 %v1157, 64
  %v1160 = vpop.permute.xlu0 %1159
  %1161 = vrot.lane.b32.xlu0 %v1158, 64
  %v1162 = vpop.permute.xlu0 %1161
  %s1165 = scalar_lea.vmem [#allocation3], 56
  %1166 = vst.msk [vmem:[%s1165] sm:$0xf] %vm367, %v1160
  %1167 = vst.msk [vmem:[%s1165 + $0x4] sm:$0xf] %vm367, %v1162
  %v1168 = vld [vmem:[#allocation3] sm:$0xf]
  %v1169 = vld [vmem:[#allocation3 + $0x4] sm:$0xf]
  %v1170 = vld [vmem:[#allocation3 + $0x8] sm:$0xf]
  %v1171 = vld [vmem:[#allocation3 + $0xc] sm:$0xf]
  %v1172 = vld [vmem:[#allocation3 + $0x10] sm:$0xf]
  %v1173 = vld [vmem:[#allocation3 + $0x14] sm:$0xf]
  %v1174 = vld [vmem:[#allocation3 + $0x18] sm:$0xf]
  %v1175 = vld [vmem:[#allocation3 + $0x1c] sm:$0xf]
  %v1176 = vld [vmem:[#allocation3 + $0x20] sm:$0xf]
  %v1177 = vld [vmem:[#allocation3 + $0x24] sm:$0xf]
  %v1178 = vld [vmem:[#allocation3 + $0x28] sm:$0xf]
  %v1179 = vld [vmem:[#allocation3 + $0x2c] sm:$0xf]
  %v1180 = vld [vmem:[#allocation3 + $0x30] sm:$0xf]
  %v1181 = vld [vmem:[#allocation3 + $0x34] sm:$0xf]
  %v1182 = vld [vmem:[#allocation3 + $0x38] sm:$0xf]
  %v1183 = vld [vmem:[#allocation3 + $0x3c] sm:$0xf]
  %v1184 = vld [vmem:[%s4] sm:$0xf]
  %v1185 = vld [vmem:[%s4 + $0x4] sm:$0xf]
  %v1186 = vld [vmem:[%s4 + $0x8] sm:$0xf]
  %v1187 = vld [vmem:[%s4 + $0xc] sm:$0xf]
  %v1188 = vld [vmem:[%s6] sm:$0x1]
  %v1190 = vlaneseq
  %v1191 = vshrl.u32 %v1190, 7
  %v1192 = vsub.s32 0, %v1191
  %v1193 = vrot.slane %v1188, %v1192
  %v1211 = vunpack.c.l.b16 %v1168
  %v1212 = vunpack.c.l.b16 %v1169
  %v1213 = vunpack.c.l.b16 %v1170
  %v1214 = vunpack.c.l.b16 %v1171
  %v1215 = vunpack.c.l.b16 %v1172
  %v1216 = vunpack.c.l.b16 %v1173
  %v1217 = vunpack.c.l.b16 %v1174
  %v1218 = vunpack.c.l.b16 %v1175
  %v1219 = vunpack.c.l.b16 %v1176
  %v1220 = vunpack.c.l.b16 %v1177
  %v1221 = vunpack.c.l.b16 %v1178
  %v1222 = vunpack.c.l.b16 %v1179
  %v1223 = vunpack.c.l.b16 %v1180
  %v1224 = vunpack.c.l.b16 %v1181
  %v1225 = vunpack.c.l.b16 %v1182
  %v1226 = vunpack.c.l.b16 %v1183
  %v1227 = vpack.c.b16 %v1212, %v1211
  %v1228 = vpack.c.b16 %v1214, %v1213
  %v1229 = vpack.c.b16 %v1216, %v1215
  %v1230 = vpack.c.b16 %v1218, %v1217
  %v1231 = vpack.c.b16 %v1220, %v1219
  %v1232 = vpack.c.b16 %v1222, %v1221
  %v1233 = vpack.c.b16 %v1224, %v1223
  %v1234 = vpack.c.b16 %v1226, %v1225
  %v1239 = vunpack.c.l.b16 %v1184
  %v1240 = vunpack.c.l.b16 %v1185
  %v1241 = vunpack.c.l.b16 %v1186
  %v1242 = vunpack.c.l.b16 %v1187
  %v1243 = vpack.c.b16 %v1240, %v1239
  %v1244 = vpack.c.b16 %v1242, %v1241
  %v1248 = vsel %vm260, %v1227, 0
  %v1251 = vsel %vm260, %v1228, 0
  %v1254 = vsel %vm260, %v1229, 0
  %v1257 = vsel %vm260, %v1230, 0
  %v1260 = vsel %vm260, %v1231, 0
  %v1263 = vsel %vm260, %v1232, 0
  %v1266 = vsel %vm260, %v1233, 0
  %v1269 = vsel %vm260, %v1234, 0
  %1271 = vmatprep.subr.bf16.mxu0 0
  %1272 = vmatpush1.bf16.msra.mxu0 0
  %1273 = vmatprep.subr.bf16.mxu0 0
  %1274 = vmatpush1.bf16.msra.mxu0 0
  %1275 = vmatprep.subr.bf16.mxu0 0
  %1276 = vmatpush1.bf16.msra.mxu0 0
  %1277 = vmatprep.subr.bf16.mxu0 0
  %1278 = vmatpush1.bf16.msra.mxu0 0
  %1279 = vmatprep.subr.bf16.mxu0 0
  %1280 = vmatpush1.bf16.msra.mxu0 0
  %1281 = vmatprep.subr.bf16.mxu0 0
  %1282 = vmatpush1.bf16.msra.mxu0 0
  %1283 = vmatprep.subr.bf16.mxu0 0
  %1284 = vmatpush1.bf16.msra.mxu0 %v1244
  %1285 = vmatprep.subr.bf16.mxu0 0
  %1286 = vmatpush1.bf16.msra.mxu0 %v1243
  %1287 = vmatprep.subr.bf16.mxu0 0
  %1288 = vmatpush2.bf16.msra.mxu0 0
  %1289 = vmatprep.subr.bf16.mxu0 0
  %1290 = vmatpush2.bf16.msra.mxu0 0
  %1291 = vmatprep.subr.bf16.mxu0 0
  %1292 = vmatpush2.bf16.msra.mxu0 0
  %1293 = vmatprep.subr.bf16.mxu0 0
  %1294 = vmatpush2.bf16.msra.mxu0 0
  %1295 = vmatprep.subr.bf16.mxu0 0
  %1296 = vmatpush2.bf16.msra.mxu0 0
  %1297 = vmatprep.subr.bf16.mxu0 0
  %1298 = vmatpush2.bf16.msra.mxu0 0
  %1299 = vmatprep.subr.bf16.mxu0 0
  %1300 = vmatpush2.bf16.msra.mxu0 0
  %1301 = vmatprep.subr.bf16.mxu0 0
  %1302 = vmatpush2.bf16.msra.mxu0 0
  %1303 = vmatprep.mubr.bf16.mxu0 0
  %1304 = vmatmul.mubr.bf16.gmra.mxu0 %v1248
  %v1305 = vpop.f32.mrf.mxu0
  %v1306 = vadd.f32 %v1193, %v1305
  %v1307 = vpop.f32.mrf.mxu0
  %v1308 = vpop.f32.mrf.mxu0
  %v1309 = vadd.f32 %v1193, %v1308
  %v1310 = vpop.f32.mrf.mxu0
  %1311 = vmatprep.mubr.bf16.mxu0 0
  %1312 = vmatmul.mubr.bf16.gmra.mxu0 %v1251
  %v1313 = vpop.f32.mrf.mxu0
  %v1314 = vadd.f32 %v1193, %v1313
  %v1315 = vpop.f32.mrf.mxu0
  %v1316 = vpop.f32.mrf.mxu0
  %v1317 = vadd.f32 %v1193, %v1316
  %v1318 = vpop.f32.mrf.mxu0
  %1319 = vmatprep.mubr.bf16.mxu0 0
  %1320 = vmatmul.mubr.bf16.gmra.mxu0 %v1254
  %v1321 = vpop.f32.mrf.mxu0
  %v1322 = vadd.f32 %v1193, %v1321
  %v1323 = vpop.f32.mrf.mxu0
  %v1324 = vpop.f32.mrf.mxu0
  %v1325 = vadd.f32 %v1193, %v1324
  %v1326 = vpop.f32.mrf.mxu0
  %1327 = vmatprep.mubr.bf16.mxu0 0
  %1328 = vmatmul.mubr.bf16.gmra.mxu0 %v1257
  %v1329 = vpop.f32.mrf.mxu0
  %v1330 = vadd.f32 %v1193, %v1329
  %v1331 = vpop.f32.mrf.mxu0
  %v1332 = vpop.f32.mrf.mxu0
  %v1333 = vadd.f32 %v1193, %v1332
  %v1334 = vpop.f32.mrf.mxu0
  %1335 = vmatprep.mubr.bf16.mxu0 0
  %1336 = vmatmul.mubr.bf16.gmra.mxu0 %v1260
  %v1337 = vpop.f32.mrf.mxu0
  %v1338 = vadd.f32 %v1193, %v1337
  %v1339 = vpop.f32.mrf.mxu0
  %v1340 = vpop.f32.mrf.mxu0
  %v1341 = vadd.f32 %v1193, %v1340
  %v1342 = vpop.f32.mrf.mxu0
  %1343 = vmatprep.mubr.bf16.mxu0 0
  %1344 = vmatmul.mubr.bf16.gmra.mxu0 %v1263
  %v1345 = vpop.f32.mrf.mxu0
  %v1346 = vadd.f32 %v1193, %v1345
  %v1347 = vpop.f32.mrf.mxu0
  %v1348 = vpop.f32.mrf.mxu0
  %v1349 = vadd.f32 %v1193, %v1348
  %v1350 = vpop.f32.mrf.mxu0
  %1351 = vmatprep.mubr.bf16.mxu0 0
  %1352 = vmatmul.mubr.bf16.gmra.mxu0 %v1266
  %v1353 = vpop.f32.mrf.mxu0
  %v1354 = vadd.f32 %v1193, %v1353
  %v1355 = vpop.f32.mrf.mxu0
  %v1356 = vpop.f32.mrf.mxu0
  %v1357 = vadd.f32 %v1193, %v1356
  %v1358 = vpop.f32.mrf.mxu0
  %1359 = vmatprep.mubr.bf16.mxu0 0
  %1360 = vmatmul.mubr.bf16.gmra.mxu0 %v1269
  %v1361 = vpop.f32.mrf.mxu0
  %v1362 = vadd.f32 %v1193, %v1361
  %v1363 = vpop.f32.mrf.mxu0
  %v1364 = vpop.f32.mrf.mxu0
  %v1365 = vadd.f32 %v1193, %v1364
  %v1366 = vpop.f32.mrf.mxu0
  %1367 = vdwg.mxu0
  %1368 = vst [vmem:[#allocation2] sm:$0xff] %v1306
  %1369 = vst [vmem:[#allocation2 + $0x8] sm:$0xff] %v1309
  %1370 = vst [vmem:[#allocation2 + $0x10] sm:$0xff] %v1314
  %1371 = vst [vmem:[#allocation2 + $0x18] sm:$0xff] %v1317
  %1372 = vst [vmem:[#allocation2 + $0x20] sm:$0xff] %v1322
  %1373 = vst [vmem:[#allocation2 + $0x28] sm:$0xff] %v1325
  %1374 = vst [vmem:[#allocation2 + $0x30] sm:$0xff] %v1330
  %1375 = vst [vmem:[#allocation2 + $0x38] sm:$0xff] %v1333
  %1376 = vst [vmem:[#allocation2 + $0x40] sm:$0xff] %v1338
  %1377 = vst [vmem:[#allocation2 + $0x48] sm:$0xff] %v1341
  %1378 = vst [vmem:[#allocation2 + $0x50] sm:$0xff] %v1346
  %1379 = vst [vmem:[#allocation2 + $0x58] sm:$0xff] %v1349
  %1380 = vst [vmem:[#allocation2 + $0x60] sm:$0xff] %v1354
  %1381 = vst [vmem:[#allocation2 + $0x68] sm:$0xff] %v1357
  %1382 = vst [vmem:[#allocation2 + $0x70] sm:$0xff] %v1362
  %1383 = vst [vmem:[#allocation2 + $0x78] sm:$0xff] %v1365
  %v1384 = vld [vmem:[%s5] sm:$0xf]
  %v1385 = vld [vmem:[%s5 + $0x4] sm:$0xf]
  %v1386 = vld [vmem:[%s5 + $0x8] sm:$0xf]
  %v1387 = vld [vmem:[%s5 + $0xc] sm:$0xf]
  %v1388 = vld [vmem:[#allocation2] sm:$0xff]
  %v1389 = vld [vmem:[#allocation2 + $0x8] sm:$0xff]
  %v1394 = vunpack.c.l.b16 %v1384
  %v1395 = vunpack.c.l.b16 %v1385
  %v1396 = vunpack.c.l.b16 %v1386
  %v1397 = vunpack.c.l.b16 %v1387
  %v1398 = vpack.c.b16 %v1395, %v1394
  %v1399 = vpack.c.b16 %v1397, %v1396
  %1402 = vmatprep.subr.bf16.mxu0 0
  %1403 = vmatpush1.bf16.msra.mxu0 0
  %1404 = vmatprep.subr.bf16.mxu0 0
  %1405 = vmatpush1.bf16.msra.mxu0 0
  %1406 = vmatprep.subr.bf16.mxu0 0
  %1407 = vmatpush1.bf16.msra.mxu0 0
  %1408 = vmatprep.subr.bf16.mxu0 0
  %1409 = vmatpush1.bf16.msra.mxu0 0
  %1410 = vmatprep.subr.bf16.mxu0 0
  %1411 = vmatpush1.bf16.msra.mxu0 0
  %1412 = vmatprep.subr.bf16.mxu0 0
  %1413 = vmatpush1.bf16.msra.mxu0 0
  %1414 = vmatprep.subr.bf16.mxu0 0
  %1415 = vmatpush1.bf16.msra.mxu0 %v1399
  %1416 = vmatprep.subr.bf16.mxu0 0
  %1417 = vmatpush1.bf16.msra.mxu0 %v1398
  %1418 = vmatprep.subr.bf16.mxu0 0
  %1419 = vmatpush2.bf16.msra.mxu0 0
  %1420 = vmatprep.subr.bf16.mxu0 0
  %1421 = vmatpush2.bf16.msra.mxu0 0
  %1422 = vmatprep.subr.bf16.mxu0 0
  %1423 = vmatpush2.bf16.msra.mxu0 0
  %1424 = vmatprep.subr.bf16.mxu0 0
  %1425 = vmatpush2.bf16.msra.mxu0 0
  %1426 = vmatprep.subr.bf16.mxu0 0
  %1427 = vmatpush2.bf16.msra.mxu0 0
  %1428 = vmatprep.subr.bf16.mxu0 0
  %1429 = vmatpush2.bf16.msra.mxu0 0
  %1430 = vmatprep.subr.bf16.mxu0 0
  %1431 = vmatpush2.bf16.msra.mxu0 0
  %1432 = vmatprep.subr.bf16.mxu0 0
  %1433 = vmatpush2.bf16.msra.mxu0 0
  %1434 = vmatprep.mubr.bf16.mxu0 0
  %1435 = vmatmul.mubr.bf16.gmra.mxu0 %v262
  %v1436 = vpop.f32.mrf.mxu0
  %v1437 = vadd.f32 0.0, %v1436
  %v1438 = vpop.f32.mrf.mxu0
  %v1439 = vpop.f32.mrf.mxu0
  %v1440 = vadd.f32 0.0, %v1439
  %v1441 = vpop.f32.mrf.mxu0
  %1442 = vdwg.mxu0
  %v1443 = vadd.f32 %v1388, %v1437
  %v1444 = vadd.f32 %v1389, %v1440
  %v1445 = vxor.u32 %v1443, 2147483648
  %v1446 = vxor.u32 %v1444, 2147483648
  %v1447 = vmul.f32 %v1445, 1.442695
  %v1448 = vpow.pop %v1447
  %v1449 = vmul.f32 %v1446, 1.442695
  %v1450 = vpow.pop %v1449
  %v1451 = vadd.f32 %v1448, 1.0
  %v1452 = vadd.f32 %v1450, 1.0
  %v1453 = vrcp.pop %v1451
  %v1454 = vmul.f32 1.0, %v1453
  %v1455 = vrcp.pop %v1452
  %v1456 = vmul.f32 1.0, %v1455
  %v1457 = vtanh.pop %v1443
  %v1458 = vtanh.pop %v1444
  %v1459 = vmul.f32 %v1454, 0.0
  %v1460 = vmul.f32 %v1456, 0.0
  %1463 = vrot.lane.b32.xlu0 %v1457, 32
  %v1464 = vpop.permute.xlu0 %1463
  %1465 = vrot.lane.b32.xlu0 %v1458, 32
  %v1466 = vpop.permute.xlu0 %1465
  %v1469 = vmul.f32 %v1454, %v1464
  %v1470 = vmul.f32 %v1456, %v1466
  %1473 = vrot.lane.b32.xlu0 %v1469, 32
  %v1474 = vpop.permute.xlu0 %1473
  %1475 = vrot.lane.b32.xlu0 %v1470, 32
  %v1476 = vpop.permute.xlu0 %1475
  %v1479 = vadd.f32 %v1459, %v1474
  %v1480 = vadd.f32 %v1460, %v1476
  %v1481 = vtanh.pop %v1479
  %v1482 = vtanh.pop %v1480
  %1485 = vrot.lane.b32.xlu0 %v1481, 32
  %v1486 = vpop.permute.xlu0 %1485
  %1487 = vrot.lane.b32.xlu0 %v1482, 32
  %v1488 = vpop.permute.xlu0 %1487
  %v1491 = vmul.f32 %v1454, %v1486
  %v1492 = vmul.f32 %v1456, %v1488
  %v1493 = vpack.c.bf16 %v1492, %v1491
  %v1494 = vld [vmem:[%s370] sm:$0xff]
  %v1495 = vld [vmem:[%s370 + $0x8] sm:$0xff]
  %1497 = vrot.lane.b32.xlu0 %v1493, 64
  %v1498 = vpop.permute.xlu0 %1497
  %v1500 = vsel %vm260, %v1498, 0
  %1502 = vmatprep.subr.bf16.mxu0 0
  %1503 = vmatpush1.bf16.msra.mxu0 0
  %1504 = vmatprep.subr.bf16.mxu0 0
  %1505 = vmatpush1.bf16.msra.mxu0 0
  %1506 = vmatprep.subr.bf16.mxu0 0
  %1507 = vmatpush1.bf16.msra.mxu0 0
  %1508 = vmatprep.subr.bf16.mxu0 0
  %1509 = vmatpush1.bf16.msra.mxu0 0
  %1510 = vmatprep.subr.bf16.mxu0 0
  %1511 = vmatpush1.bf16.msra.mxu0 0
  %1512 = vmatprep.subr.bf16.mxu0 0
  %1513 = vmatpush1.bf16.msra.mxu0 0
  %1514 = vmatprep.subr.bf16.mxu0 0
  %1515 = vmatpush1.bf16.msra.mxu0 %v1399
  %1516 = vmatprep.subr.bf16.mxu0 0
  %1517 = vmatpush1.bf16.msra.mxu0 %v1398
  %1518 = vmatprep.subr.bf16.mxu0 0
  %1519 = vmatpush2.bf16.msra.mxu0 0
  %1520 = vmatprep.subr.bf16.mxu0 0
  %1521 = vmatpush2.bf16.msra.mxu0 0
  %1522 = vmatprep.subr.bf16.mxu0 0
  %1523 = vmatpush2.bf16.msra.mxu0 0
  %1524 = vmatprep.subr.bf16.mxu0 0
  %1525 = vmatpush2.bf16.msra.mxu0 0
  %1526 = vmatprep.subr.bf16.mxu0 0
  %1527 = vmatpush2.bf16.msra.mxu0 0
  %1528 = vmatprep.subr.bf16.mxu0 0
  %1529 = vmatpush2.bf16.msra.mxu0 0
  %1530 = vmatprep.subr.bf16.mxu0 0
  %1531 = vmatpush2.bf16.msra.mxu0 0
  %1532 = vmatprep.subr.bf16.mxu0 0
  %1533 = vmatpush2.bf16.msra.mxu0 0
  %1534 = vmatprep.mubr.bf16.mxu0 0
  %1535 = vmatmul.mubr.bf16.gmra.mxu0 %v1500
  %v1536 = vpop.f32.mrf.mxu0
  %v1537 = vadd.f32 0.0, %v1536
  %v1538 = vpop.f32.mrf.mxu0
  %v1539 = vpop.f32.mrf.mxu0
  %v1540 = vadd.f32 0.0, %v1539
  %v1541 = vpop.f32.mrf.mxu0
  %1542 = vdwg.mxu0
  %v1543 = vadd.f32 %v1494, %v1537
  %v1544 = vadd.f32 %v1495, %v1540
  %v1545 = vxor.u32 %v1543, 2147483648
  %v1546 = vxor.u32 %v1544, 2147483648
  %v1547 = vmul.f32 %v1545, 1.442695
  %v1548 = vpow.pop %v1547
  %v1549 = vmul.f32 %v1546, 1.442695
  %v1550 = vpow.pop %v1549
  %v1551 = vadd.f32 %v1548, 1.0
  %v1552 = vadd.f32 %v1550, 1.0
  %v1553 = vrcp.pop %v1551
  %v1554 = vmul.f32 1.0, %v1553
  %v1555 = vrcp.pop %v1552
  %v1556 = vmul.f32 1.0, %v1555
  %v1557 = vtanh.pop %v1543
  %v1558 = vtanh.pop %v1544
  %v1559 = vmul.f32 %v1554, %v1479
  %v1560 = vmul.f32 %v1556, %v1480
  %1563 = vrot.lane.b32.xlu0 %v1557, 32
  %v1564 = vpop.permute.xlu0 %1563
  %1565 = vrot.lane.b32.xlu0 %v1558, 32
  %v1566 = vpop.permute.xlu0 %1565
  %v1569 = vmul.f32 %v1554, %v1564
  %v1570 = vmul.f32 %v1556, %v1566
  %1573 = vrot.lane.b32.xlu0 %v1569, 32
  %v1574 = vpop.permute.xlu0 %1573
  %1575 = vrot.lane.b32.xlu0 %v1570, 32
  %v1576 = vpop.permute.xlu0 %1575
  %v1579 = vadd.f32 %v1559, %v1574
  %v1580 = vadd.f32 %v1560, %v1576
  %v1581 = vtanh.pop %v1579
  %v1582 = vtanh.pop %v1580
  %1585 = vrot.lane.b32.xlu0 %v1581, 32
  %v1586 = vpop.permute.xlu0 %1585
  %1587 = vrot.lane.b32.xlu0 %v1582, 32
  %v1588 = vpop.permute.xlu0 %1587
  %v1591 = vmul.f32 %v1554, %v1586
  %v1592 = vmul.f32 %v1556, %v1588
  %v1593 = vpack.c.bf16 %v1592, %v1591
  %v1594 = vld [vmem:[%s484] sm:$0xff]
  %v1595 = vld [vmem:[%s484 + $0x8] sm:$0xff]
  %1597 = vrot.lane.b32.xlu0 %v1593, 64
  %v1598 = vpop.permute.xlu0 %1597
  %v1600 = vsel %vm260, %v1598, 0
  %1602 = vmatprep.subr.bf16.mxu0 0
  %1603 = vmatpush1.bf16.msra.mxu0 0
  %1604 = vmatprep.subr.bf16.mxu0 0
  %1605 = vmatpush1.bf16.msra.mxu0 0
  %1606 = vmatprep.subr.bf16.mxu0 0
  %1607 = vmatpush1.bf16.msra.mxu0 0
  %1608 = vmatprep.subr.bf16.mxu0 0
  %1609 = vmatpush1.bf16.msra.mxu0 0
  %1610 = vmatprep.subr.bf16.mxu0 0
  %1611 = vmatpush1.bf16.msra.mxu0 0
  %1612 = vmatprep.subr.bf16.mxu0 0
  %1613 = vmatpush1.bf16.msra.mxu0 0
  %1614 = vmatprep.subr.bf16.mxu0 0
  %1615 = vmatpush1.bf16.msra.mxu0 %v1399
  %1616 = vmatprep.subr.bf16.mxu0 0
  %1617 = vmatpush1.bf16.msra.mxu0 %v1398
  %1618 = vmatprep.subr.bf16.mxu0 0
  %1619 = vmatpush2.bf16.msra.mxu0 0
  %1620 = vmatprep.subr.bf16.mxu0 0
  %1621 = vmatpush2.bf16.msra.mxu0 0
  %1622 = vmatprep.subr.bf16.mxu0 0
  %1623 = vmatpush2.bf16.msra.mxu0 0
  %1624 = vmatprep.subr.bf16.mxu0 0
  %1625 = vmatpush2.bf16.msra.mxu0 0
  %1626 = vmatprep.subr.bf16.mxu0 0
  %1627 = vmatpush2.bf16.msra.mxu0 0
  %1628 = vmatprep.subr.bf16.mxu0 0
  %1629 = vmatpush2.bf16.msra.mxu0 0
  %1630 = vmatprep.subr.bf16.mxu0 0
  %1631 = vmatpush2.bf16.msra.mxu0 0
  %1632 = vmatprep.subr.bf16.mxu0 0
  %1633 = vmatpush2.bf16.msra.mxu0 0
  %1634 = vmatprep.mubr.bf16.mxu0 0
  %1635 = vmatmul.mubr.bf16.gmra.mxu0 %v1600
  %v1636 = vpop.f32.mrf.mxu0
  %v1637 = vadd.f32 0.0, %v1636
  %v1638 = vpop.f32.mrf.mxu0
  %v1639 = vpop.f32.mrf.mxu0
  %v1640 = vadd.f32 0.0, %v1639
  %v1641 = vpop.f32.mrf.mxu0
  %1642 = vdwg.mxu0
  %v1643 = vadd.f32 %v1594, %v1637
  %v1644 = vadd.f32 %v1595, %v1640
  %v1645 = vxor.u32 %v1643, 2147483648
  %v1646 = vxor.u32 %v1644, 2147483648
  %v1647 = vmul.f32 %v1645, 1.442695
  %v1648 = vpow.pop %v1647
  %v1649 = vmul.f32 %v1646, 1.442695
  %v1650 = vpow.pop %v1649
  %v1651 = vadd.f32 %v1648, 1.0
  %v1652 = vadd.f32 %v1650, 1.0
  %v1653 = vrcp.pop %v1651
  %v1654 = vmul.f32 1.0, %v1653
  %v1655 = vrcp.pop %v1652
  %v1656 = vmul.f32 1.0, %v1655
  %v1657 = vtanh.pop %v1643
  %v1658 = vtanh.pop %v1644
  %v1659 = vmul.f32 %v1654, %v1579
  %v1660 = vmul.f32 %v1656, %v1580
  %1663 = vrot.lane.b32.xlu0 %v1657, 32
  %v1664 = vpop.permute.xlu0 %1663
  %1665 = vrot.lane.b32.xlu0 %v1658, 32
  %v1666 = vpop.permute.xlu0 %1665
  %v1669 = vmul.f32 %v1654, %v1664
  %v1670 = vmul.f32 %v1656, %v1666
  %1673 = vrot.lane.b32.xlu0 %v1669, 32
  %v1674 = vpop.permute.xlu0 %1673
  %1675 = vrot.lane.b32.xlu0 %v1670, 32
  %v1676 = vpop.permute.xlu0 %1675
  %v1679 = vadd.f32 %v1659, %v1674
  %v1680 = vadd.f32 %v1660, %v1676
  %v1681 = vtanh.pop %v1679
  %v1682 = vtanh.pop %v1680
  %1685 = vrot.lane.b32.xlu0 %v1681, 32
  %v1686 = vpop.permute.xlu0 %1685
  %1687 = vrot.lane.b32.xlu0 %v1682, 32
  %v1688 = vpop.permute.xlu0 %1687
  %v1691 = vmul.f32 %v1654, %v1686
  %v1692 = vmul.f32 %v1656, %v1688
  %v1693 = vpack.c.bf16 %v1692, %v1691
  %v1694 = vld [vmem:[%s598] sm:$0xff]
  %v1695 = vld [vmem:[%s598 + $0x8] sm:$0xff]
  %1697 = vrot.lane.b32.xlu0 %v1693, 64
  %v1698 = vpop.permute.xlu0 %1697
  %v1700 = vsel %vm260, %v1698, 0
  %1702 = vmatprep.subr.bf16.mxu0 0
  %1703 = vmatpush1.bf16.msra.mxu0 0
  %1704 = vmatprep.subr.bf16.mxu0 0
  %1705 = vmatpush1.bf16.msra.mxu0 0
  %1706 = vmatprep.subr.bf16.mxu0 0
  %1707 = vmatpush1.bf16.msra.mxu0 0
  %1708 = vmatprep.subr.bf16.mxu0 0
  %1709 = vmatpush1.bf16.msra.mxu0 0
  %1710 = vmatprep.subr.bf16.mxu0 0
  %1711 = vmatpush1.bf16.msra.mxu0 0
  %1712 = vmatprep.subr.bf16.mxu0 0
  %1713 = vmatpush1.bf16.msra.mxu0 0
  %1714 = vmatprep.subr.bf16.mxu0 0
  %1715 = vmatpush1.bf16.msra.mxu0 %v1399
  %1716 = vmatprep.subr.bf16.mxu0 0
  %1717 = vmatpush1.bf16.msra.mxu0 %v1398
  %1718 = vmatprep.subr.bf16.mxu0 0
  %1719 = vmatpush2.bf16.msra.mxu0 0
  %1720 = vmatprep.subr.bf16.mxu0 0
  %1721 = vmatpush2.bf16.msra.mxu0 0
  %1722 = vmatprep.subr.bf16.mxu0 0
  %1723 = vmatpush2.bf16.msra.mxu0 0
  %1724 = vmatprep.subr.bf16.mxu0 0
  %1725 = vmatpush2.bf16.msra.mxu0 0
  %1726 = vmatprep.subr.bf16.mxu0 0
  %1727 = vmatpush2.bf16.msra.mxu0 0
  %1728 = vmatprep.subr.bf16.mxu0 0
  %1729 = vmatpush2.bf16.msra.mxu0 0
  %1730 = vmatprep.subr.bf16.mxu0 0
  %1731 = vmatpush2.bf16.msra.mxu0 0
  %1732 = vmatprep.subr.bf16.mxu0 0
  %1733 = vmatpush2.bf16.msra.mxu0 0
  %1734 = vmatprep.mubr.bf16.mxu0 0
  %1735 = vmatmul.mubr.bf16.gmra.mxu0 %v1700
  %v1736 = vpop.f32.mrf.mxu0
  %v1737 = vadd.f32 0.0, %v1736
  %v1738 = vpop.f32.mrf.mxu0
  %v1739 = vpop.f32.mrf.mxu0
  %v1740 = vadd.f32 0.0, %v1739
  %v1741 = vpop.f32.mrf.mxu0
  %1742 = vdwg.mxu0
  %v1743 = vadd.f32 %v1694, %v1737
  %v1744 = vadd.f32 %v1695, %v1740
  %v1745 = vxor.u32 %v1743, 2147483648
  %v1746 = vxor.u32 %v1744, 2147483648
  %v1747 = vmul.f32 %v1745, 1.442695
  %v1748 = vpow.pop %v1747
  %v1749 = vmul.f32 %v1746, 1.442695
  %v1750 = vpow.pop %v1749
  %v1751 = vadd.f32 %v1748, 1.0
  %v1752 = vadd.f32 %v1750, 1.0
  %v1753 = vrcp.pop %v1751
  %v1754 = vmul.f32 1.0, %v1753
  %v1755 = vrcp.pop %v1752
  %v1756 = vmul.f32 1.0, %v1755
  %v1757 = vtanh.pop %v1743
  %v1758 = vtanh.pop %v1744
  %v1759 = vmul.f32 %v1754, %v1679
  %v1760 = vmul.f32 %v1756, %v1680
  %1763 = vrot.lane.b32.xlu0 %v1757, 32
  %v1764 = vpop.permute.xlu0 %1763
  %1765 = vrot.lane.b32.xlu0 %v1758, 32
  %v1766 = vpop.permute.xlu0 %1765
  %v1769 = vmul.f32 %v1754, %v1764
  %v1770 = vmul.f32 %v1756, %v1766
  %1773 = vrot.lane.b32.xlu0 %v1769, 32
  %v1774 = vpop.permute.xlu0 %1773
  %1775 = vrot.lane.b32.xlu0 %v1770, 32
  %v1776 = vpop.permute.xlu0 %1775
  %v1779 = vadd.f32 %v1759, %v1774
  %v1780 = vadd.f32 %v1760, %v1776
  %v1781 = vtanh.pop %v1779
  %v1782 = vtanh.pop %v1780
  %1785 = vrot.lane.b32.xlu0 %v1781, 32
  %v1786 = vpop.permute.xlu0 %1785
  %1787 = vrot.lane.b32.xlu0 %v1782, 32
  %v1788 = vpop.permute.xlu0 %1787
  %v1791 = vmul.f32 %v1754, %v1786
  %v1792 = vmul.f32 %v1756, %v1788
  %v1793 = vpack.c.bf16 %v1792, %v1791
  %v1794 = vld [vmem:[%s712] sm:$0xff]
  %v1795 = vld [vmem:[%s712 + $0x8] sm:$0xff]
  %1797 = vrot.lane.b32.xlu0 %v1793, 64
  %v1798 = vpop.permute.xlu0 %1797
  %v1800 = vsel %vm260, %v1798, 0
  %1802 = vmatprep.subr.bf16.mxu0 0
  %1803 = vmatpush1.bf16.msra.mxu0 0
  %1804 = vmatprep.subr.bf16.mxu0 0
  %1805 = vmatpush1.bf16.msra.mxu0 0
  %1806 = vmatprep.subr.bf16.mxu0 0
  %1807 = vmatpush1.bf16.msra.mxu0 0
  %1808 = vmatprep.subr.bf16.mxu0 0
  %1809 = vmatpush1.bf16.msra.mxu0 0
  %1810 = vmatprep.subr.bf16.mxu0 0
  %1811 = vmatpush1.bf16.msra.mxu0 0
  %1812 = vmatprep.subr.bf16.mxu0 0
  %1813 = vmatpush1.bf16.msra.mxu0 0
  %1814 = vmatprep.subr.bf16.mxu0 0
  %1815 = vmatpush1.bf16.msra.mxu0 %v1399
  %1816 = vmatprep.subr.bf16.mxu0 0
  %1817 = vmatpush1.bf16.msra.mxu0 %v1398
  %1818 = vmatprep.subr.bf16.mxu0 0
  %1819 = vmatpush2.bf16.msra.mxu0 0
  %1820 = vmatprep.subr.bf16.mxu0 0
  %1821 = vmatpush2.bf16.msra.mxu0 0
  %1822 = vmatprep.subr.bf16.mxu0 0
  %1823 = vmatpush2.bf16.msra.mxu0 0
  %1824 = vmatprep.subr.bf16.mxu0 0
  %1825 = vmatpush2.bf16.msra.mxu0 0
  %1826 = vmatprep.subr.bf16.mxu0 0
  %1827 = vmatpush2.bf16.msra.mxu0 0
  %1828 = vmatprep.subr.bf16.mxu0 0
  %1829 = vmatpush2.bf16.msra.mxu0 0
  %1830 = vmatprep.subr.bf16.mxu0 0
  %1831 = vmatpush2.bf16.msra.mxu0 0
  %1832 = vmatprep.subr.bf16.mxu0 0
  %1833 = vmatpush2.bf16.msra.mxu0 0
  %1834 = vmatprep.mubr.bf16.mxu0 0
  %1835 = vmatmul.mubr.bf16.gmra.mxu0 %v1800
  %v1836 = vpop.f32.mrf.mxu0
  %v1837 = vadd.f32 0.0, %v1836
  %v1838 = vpop.f32.mrf.mxu0
  %v1839 = vpop.f32.mrf.mxu0
  %v1840 = vadd.f32 0.0, %v1839
  %v1841 = vpop.f32.mrf.mxu0
  %1842 = vdwg.mxu0
  %v1843 = vadd.f32 %v1794, %v1837
  %v1844 = vadd.f32 %v1795, %v1840
  %v1845 = vxor.u32 %v1843, 2147483648
  %v1846 = vxor.u32 %v1844, 2147483648
  %v1847 = vmul.f32 %v1845, 1.442695
  %v1848 = vpow.pop %v1847
  %v1849 = vmul.f32 %v1846, 1.442695
  %v1850 = vpow.pop %v1849
  %v1851 = vadd.f32 %v1848, 1.0
  %v1852 = vadd.f32 %v1850, 1.0
  %v1853 = vrcp.pop %v1851
  %v1854 = vmul.f32 1.0, %v1853
  %v1855 = vrcp.pop %v1852
  %v1856 = vmul.f32 1.0, %v1855
  %v1857 = vtanh.pop %v1843
  %v1858 = vtanh.pop %v1844
  %v1859 = vmul.f32 %v1854, %v1779
  %v1860 = vmul.f32 %v1856, %v1780
  %1863 = vrot.lane.b32.xlu0 %v1857, 32
  %v1864 = vpop.permute.xlu0 %1863
  %1865 = vrot.lane.b32.xlu0 %v1858, 32
  %v1866 = vpop.permute.xlu0 %1865
  %v1869 = vmul.f32 %v1854, %v1864
  %v1870 = vmul.f32 %v1856, %v1866
  %1873 = vrot.lane.b32.xlu0 %v1869, 32
  %v1874 = vpop.permute.xlu0 %1873
  %1875 = vrot.lane.b32.xlu0 %v1870, 32
  %v1876 = vpop.permute.xlu0 %1875
  %v1879 = vadd.f32 %v1859, %v1874
  %v1880 = vadd.f32 %v1860, %v1876
  %v1881 = vtanh.pop %v1879
  %v1882 = vtanh.pop %v1880
  %1885 = vrot.lane.b32.xlu0 %v1881, 32
  %v1886 = vpop.permute.xlu0 %1885
  %1887 = vrot.lane.b32.xlu0 %v1882, 32
  %v1888 = vpop.permute.xlu0 %1887
  %v1891 = vmul.f32 %v1854, %v1886
  %v1892 = vmul.f32 %v1856, %v1888
  %v1893 = vpack.c.bf16 %v1892, %v1891
  %v1894 = vld [vmem:[%s826] sm:$0xff]
  %v1895 = vld [vmem:[%s826 + $0x8] sm:$0xff]
  %1897 = vrot.lane.b32.xlu0 %v1893, 64
  %v1898 = vpop.permute.xlu0 %1897
  %v1900 = vsel %vm260, %v1898, 0
  %1902 = vmatprep.subr.bf16.mxu0 0
  %1903 = vmatpush1.bf16.msra.mxu0 0
  %1904 = vmatprep.subr.bf16.mxu0 0
  %1905 = vmatpush1.bf16.msra.mxu0 0
  %1906 = vmatprep.subr.bf16.mxu0 0
  %1907 = vmatpush1.bf16.msra.mxu0 0
  %1908 = vmatprep.subr.bf16.mxu0 0
  %1909 = vmatpush1.bf16.msra.mxu0 0
  %1910 = vmatprep.subr.bf16.mxu0 0
  %1911 = vmatpush1.bf16.msra.mxu0 0
  %1912 = vmatprep.subr.bf16.mxu0 0
  %1913 = vmatpush1.bf16.msra.mxu0 0
  %1914 = vmatprep.subr.bf16.mxu0 0
  %1915 = vmatpush1.bf16.msra.mxu0 %v1399
  %1916 = vmatprep.subr.bf16.mxu0 0
  %1917 = vmatpush1.bf16.msra.mxu0 %v1398
  %1918 = vmatprep.subr.bf16.mxu0 0
  %1919 = vmatpush2.bf16.msra.mxu0 0
  %1920 = vmatprep.subr.bf16.mxu0 0
  %1921 = vmatpush2.bf16.msra.mxu0 0
  %1922 = vmatprep.subr.bf16.mxu0 0
  %1923 = vmatpush2.bf16.msra.mxu0 0
  %1924 = vmatprep.subr.bf16.mxu0 0
  %1925 = vmatpush2.bf16.msra.mxu0 0
  %1926 = vmatprep.subr.bf16.mxu0 0
  %1927 = vmatpush2.bf16.msra.mxu0 0
  %1928 = vmatprep.subr.bf16.mxu0 0
  %1929 = vmatpush2.bf16.msra.mxu0 0
  %1930 = vmatprep.subr.bf16.mxu0 0
  %1931 = vmatpush2.bf16.msra.mxu0 0
  %1932 = vmatprep.subr.bf16.mxu0 0
  %1933 = vmatpush2.bf16.msra.mxu0 0
  %1934 = vmatprep.mubr.bf16.mxu0 0
  %1935 = vmatmul.mubr.bf16.gmra.mxu0 %v1900
  %v1936 = vpop.f32.mrf.mxu0
  %v1937 = vadd.f32 0.0, %v1936
  %v1938 = vpop.f32.mrf.mxu0
  %v1939 = vpop.f32.mrf.mxu0
  %v1940 = vadd.f32 0.0, %v1939
  %v1941 = vpop.f32.mrf.mxu0
  %1942 = vdwg.mxu0
  %v1943 = vadd.f32 %v1894, %v1937
  %v1944 = vadd.f32 %v1895, %v1940
  %v1945 = vxor.u32 %v1943, 2147483648
  %v1946 = vxor.u32 %v1944, 2147483648
  %v1947 = vmul.f32 %v1945, 1.442695
  %v1948 = vpow.pop %v1947
  %v1949 = vmul.f32 %v1946, 1.442695
  %v1950 = vpow.pop %v1949
  %v1951 = vadd.f32 %v1948, 1.0
  %v1952 = vadd.f32 %v1950, 1.0
  %v1953 = vrcp.pop %v1951
  %v1954 = vmul.f32 1.0, %v1953
  %v1955 = vrcp.pop %v1952
  %v1956 = vmul.f32 1.0, %v1955
  %v1957 = vtanh.pop %v1943
  %v1958 = vtanh.pop %v1944
  %v1959 = vmul.f32 %v1954, %v1879
  %v1960 = vmul.f32 %v1956, %v1880
  %1963 = vrot.lane.b32.xlu0 %v1957, 32
  %v1964 = vpop.permute.xlu0 %1963
  %1965 = vrot.lane.b32.xlu0 %v1958, 32
  %v1966 = vpop.permute.xlu0 %1965
  %v1969 = vmul.f32 %v1954, %v1964
  %v1970 = vmul.f32 %v1956, %v1966
  %1973 = vrot.lane.b32.xlu0 %v1969, 32
  %v1974 = vpop.permute.xlu0 %1973
  %1975 = vrot.lane.b32.xlu0 %v1970, 32
  %v1976 = vpop.permute.xlu0 %1975
  %v1979 = vadd.f32 %v1959, %v1974
  %v1980 = vadd.f32 %v1960, %v1976
  %v1981 = vtanh.pop %v1979
  %v1982 = vtanh.pop %v1980
  %1985 = vrot.lane.b32.xlu0 %v1981, 32
  %v1986 = vpop.permute.xlu0 %1985
  %1987 = vrot.lane.b32.xlu0 %v1982, 32
  %v1988 = vpop.permute.xlu0 %1987
  %v1991 = vmul.f32 %v1954, %v1986
  %v1992 = vmul.f32 %v1956, %v1988
  %v1993 = vpack.c.bf16 %v1992, %v1991
  %v1994 = vld [vmem:[%s940] sm:$0xff]
  %v1995 = vld [vmem:[%s940 + $0x8] sm:$0xff]
  %1997 = vrot.lane.b32.xlu0 %v1993, 64
  %v1998 = vpop.permute.xlu0 %1997
  %v2000 = vsel %vm260, %v1998, 0
  %2002 = vmatprep.subr.bf16.mxu0 0
  %2003 = vmatpush1.bf16.msra.mxu0 0
  %2004 = vmatprep.subr.bf16.mxu0 0
  %2005 = vmatpush1.bf16.msra.mxu0 0
  %2006 = vmatprep.subr.bf16.mxu0 0
  %2007 = vmatpush1.bf16.msra.mxu0 0
  %2008 = vmatprep.subr.bf16.mxu0 0
  %2009 = vmatpush1.bf16.msra.mxu0 0
  %2010 = vmatprep.subr.bf16.mxu0 0
  %2011 = vmatpush1.bf16.msra.mxu0 0
  %2012 = vmatprep.subr.bf16.mxu0 0
  %2013 = vmatpush1.bf16.msra.mxu0 0
  %2014 = vmatprep.subr.bf16.mxu0 0
  %2015 = vmatpush1.bf16.msra.mxu0 %v1399
  %2016 = vmatprep.subr.bf16.mxu0 0
  %2017 = vmatpush1.bf16.msra.mxu0 %v1398
  %2018 = vmatprep.subr.bf16.mxu0 0
  %2019 = vmatpush2.bf16.msra.mxu0 0
  %2020 = vmatprep.subr.bf16.mxu0 0
  %2021 = vmatpush2.bf16.msra.mxu0 0
  %2022 = vmatprep.subr.bf16.mxu0 0
  %2023 = vmatpush2.bf16.msra.mxu0 0
  %2024 = vmatprep.subr.bf16.mxu0 0
  %2025 = vmatpush2.bf16.msra.mxu0 0
  %2026 = vmatprep.subr.bf16.mxu0 0
  %2027 = vmatpush2.bf16.msra.mxu0 0
  %2028 = vmatprep.subr.bf16.mxu0 0
  %2029 = vmatpush2.bf16.msra.mxu0 0
  %2030 = vmatprep.subr.bf16.mxu0 0
  %2031 = vmatpush2.bf16.msra.mxu0 0
  %2032 = vmatprep.subr.bf16.mxu0 0
  %2033 = vmatpush2.bf16.msra.mxu0 0
  %2034 = vmatprep.mubr.bf16.mxu0 0
  %2035 = vmatmul.mubr.bf16.gmra.mxu0 %v2000
  %v2036 = vpop.f32.mrf.mxu0
  %v2037 = vadd.f32 0.0, %v2036
  %v2038 = vpop.f32.mrf.mxu0
  %v2039 = vpop.f32.mrf.mxu0
  %v2040 = vadd.f32 0.0, %v2039
  %v2041 = vpop.f32.mrf.mxu0
  %2042 = vdwg.mxu0
  %v2043 = vadd.f32 %v1994, %v2037
  %v2044 = vadd.f32 %v1995, %v2040
  %v2045 = vxor.u32 %v2043, 2147483648
  %v2046 = vxor.u32 %v2044, 2147483648
  %v2047 = vmul.f32 %v2045, 1.442695
  %v2048 = vpow.pop %v2047
  %v2049 = vmul.f32 %v2046, 1.442695
  %v2050 = vpow.pop %v2049
  %v2051 = vadd.f32 %v2048, 1.0
  %v2052 = vadd.f32 %v2050, 1.0
  %v2053 = vrcp.pop %v2051
  %v2054 = vmul.f32 1.0, %v2053
  %v2055 = vrcp.pop %v2052
  %v2056 = vmul.f32 1.0, %v2055
  %v2057 = vtanh.pop %v2043
  %v2058 = vtanh.pop %v2044
  %v2059 = vmul.f32 %v2054, %v1979
  %v2060 = vmul.f32 %v2056, %v1980
  %2063 = vrot.lane.b32.xlu0 %v2057, 32
  %v2064 = vpop.permute.xlu0 %2063
  %2065 = vrot.lane.b32.xlu0 %v2058, 32
  %v2066 = vpop.permute.xlu0 %2065
  %v2069 = vmul.f32 %v2054, %v2064
  %v2070 = vmul.f32 %v2056, %v2066
  %2073 = vrot.lane.b32.xlu0 %v2069, 32
  %v2074 = vpop.permute.xlu0 %2073
  %2075 = vrot.lane.b32.xlu0 %v2070, 32
  %v2076 = vpop.permute.xlu0 %2075
  %v2079 = vadd.f32 %v2059, %v2074
  %v2080 = vadd.f32 %v2060, %v2076
  %v2081 = vtanh.pop %v2079
  %v2082 = vtanh.pop %v2080
  %2085 = vrot.lane.b32.xlu0 %v2081, 32
  %v2086 = vpop.permute.xlu0 %2085
  %2087 = vrot.lane.b32.xlu0 %v2082, 32
  %v2088 = vpop.permute.xlu0 %2087
  %v2091 = vmul.f32 %v2054, %v2086
  %v2092 = vmul.f32 %v2056, %v2088
  %v2093 = vpack.c.bf16 %v2092, %v2091
  %v2094 = vld [vmem:[%s1054] sm:$0xff]
  %v2095 = vld [vmem:[%s1054 + $0x8] sm:$0xff]
  %2097 = vrot.lane.b32.xlu0 %v2093, 64
  %v2098 = vpop.permute.xlu0 %2097
  %v2100 = vsel %vm260, %v2098, 0
  %2102 = vmatprep.subr.bf16.mxu0 0
  %2103 = vmatpush1.bf16.msra.mxu0 0
  %2104 = vmatprep.subr.bf16.mxu0 0
  %2105 = vmatpush1.bf16.msra.mxu0 0
  %2106 = vmatprep.subr.bf16.mxu0 0
  %2107 = vmatpush1.bf16.msra.mxu0 0
  %2108 = vmatprep.subr.bf16.mxu0 0
  %2109 = vmatpush1.bf16.msra.mxu0 0
  %2110 = vmatprep.subr.bf16.mxu0 0
  %2111 = vmatpush1.bf16.msra.mxu0 0
  %2112 = vmatprep.subr.bf16.mxu0 0
  %2113 = vmatpush1.bf16.msra.mxu0 0
  %2114 = vmatprep.subr.bf16.mxu0 0
  %2115 = vmatpush1.bf16.msra.mxu0 %v1399
  %2116 = vmatprep.subr.bf16.mxu0 0
  %2117 = vmatpush1.bf16.msra.mxu0 %v1398
  %2118 = vmatprep.subr.bf16.mxu0 0
  %2119 = vmatpush2.bf16.msra.mxu0 0
  %2120 = vmatprep.subr.bf16.mxu0 0
  %2121 = vmatpush2.bf16.msra.mxu0 0
  %2122 = vmatprep.subr.bf16.mxu0 0
  %2123 = vmatpush2.bf16.msra.mxu0 0
  %2124 = vmatprep.subr.bf16.mxu0 0
  %2125 = vmatpush2.bf16.msra.mxu0 0
  %2126 = vmatprep.subr.bf16.mxu0 0
  %2127 = vmatpush2.bf16.msra.mxu0 0
  %2128 = vmatprep.subr.bf16.mxu0 0
  %2129 = vmatpush2.bf16.msra.mxu0 0
  %2130 = vmatprep.subr.bf16.mxu0 0
  %2131 = vmatpush2.bf16.msra.mxu0 0
  %2132 = vmatprep.subr.bf16.mxu0 0
  %2133 = vmatpush2.bf16.msra.mxu0 0
  %2134 = vmatprep.mubr.bf16.mxu0 0
  %2135 = vmatmul.mubr.bf16.gmra.mxu0 %v2100
  %v2136 = vpop.f32.mrf.mxu0
  %v2137 = vadd.f32 0.0, %v2136
  %v2138 = vpop.f32.mrf.mxu0
  %v2139 = vpop.f32.mrf.mxu0
  %v2140 = vadd.f32 0.0, %v2139
  %v2141 = vpop.f32.mrf.mxu0
  %2142 = vdwg.mxu0
  %v2143 = vadd.f32 %v2094, %v2137
  %v2144 = vadd.f32 %v2095, %v2140
  %v2145 = vxor.u32 %v2143, 2147483648
  %v2146 = vxor.u32 %v2144, 2147483648
  %v2147 = vmul.f32 %v2145, 1.442695
  %v2148 = vpow.pop %v2147
  %v2149 = vmul.f32 %v2146, 1.442695
  %v2150 = vpow.pop %v2149
  %v2151 = vadd.f32 %v2148, 1.0
  %v2152 = vadd.f32 %v2150, 1.0
  %v2153 = vrcp.pop %v2151
  %v2154 = vmul.f32 1.0, %v2153
  %v2155 = vrcp.pop %v2152
  %v2156 = vmul.f32 1.0, %v2155
  %v2157 = vtanh.pop %v2143
  %v2158 = vtanh.pop %v2144
  %v2159 = vmul.f32 %v2154, %v2079
  %v2160 = vmul.f32 %v2156, %v2080
  %2163 = vrot.lane.b32.xlu0 %v2157, 32
  %v2164 = vpop.permute.xlu0 %2163
  %2165 = vrot.lane.b32.xlu0 %v2158, 32
  %v2166 = vpop.permute.xlu0 %2165
  %v2169 = vmul.f32 %v2154, %v2164
  %v2170 = vmul.f32 %v2156, %v2166
  %2173 = vrot.lane.b32.xlu0 %v2169, 32
  %v2174 = vpop.permute.xlu0 %2173
  %2175 = vrot.lane.b32.xlu0 %v2170, 32
  %v2176 = vpop.permute.xlu0 %2175
  %v2179 = vadd.f32 %v2159, %v2174
  %v2180 = vadd.f32 %v2160, %v2176
  %v2181 = vtanh.pop %v2179
  %v2182 = vtanh.pop %v2180
  %2185 = vrot.lane.b32.xlu0 %v2181, 32
  %v2186 = vpop.permute.xlu0 %2185
  %2187 = vrot.lane.b32.xlu0 %v2182, 32
  %v2188 = vpop.permute.xlu0 %2187
  %v2191 = vmul.f32 %v2154, %v2186
  %v2192 = vmul.f32 %v2156, %v2188
  %v2193 = vpack.c.bf16 %v2192, %v2191
  %v2194 = vld [vmem:[%s7] sm:$0xf]
  %v2195 = vld [vmem:[%s7 + $0x4] sm:$0xf]
  %v2196 = vld [vmem:[%s7 + $0x8] sm:$0xf]
  %v2197 = vld [vmem:[%s7 + $0xc] sm:$0xf]
  %v2198 = vld [vmem:[%s8] sm:$0x1]
  %v2200 = vlaneseq
  %v2201 = vshrl.u32 %v2200, 7
  %v2202 = vsub.s32 0, %v2201
  %v2203 = vrot.slane %v2198, %v2202
  %2206 = vrot.lane.b32.xlu0 %v2193, 64
  %v2207 = vpop.permute.xlu0 %2206
  %v2212 = vunpack.c.l.b16 %v2194
  %v2213 = vunpack.c.l.b16 %v2195
  %v2214 = vunpack.c.l.b16 %v2196
  %v2215 = vunpack.c.l.b16 %v2197
  %v2216 = vpack.c.b16 %v2213, %v2212
  %v2217 = vpack.c.b16 %v2215, %v2214
  %v2221 = vsel %vm260, %v2207, 0
  %2223 = vmatprep.subr.bf16.mxu0 0
  %2224 = vmatpush1.bf16.msra.mxu0 0
  %2225 = vmatprep.subr.bf16.mxu0 0
  %2226 = vmatpush1.bf16.msra.mxu0 0
  %2227 = vmatprep.subr.bf16.mxu0 0
  %2228 = vmatpush1.bf16.msra.mxu0 0
  %2229 = vmatprep.subr.bf16.mxu0 0
  %2230 = vmatpush1.bf16.msra.mxu0 0
  %2231 = vmatprep.subr.bf16.mxu0 0
  %2232 = vmatpush1.bf16.msra.mxu0 0
  %2233 = vmatprep.subr.bf16.mxu0 0
  %2234 = vmatpush1.bf16.msra.mxu0 0
  %2235 = vmatprep.subr.bf16.mxu0 0
  %2236 = vmatpush1.bf16.msra.mxu0 %v2217
  %2237 = vmatprep.subr.bf16.mxu0 0
  %2238 = vmatpush1.bf16.msra.mxu0 %v2216
  %2239 = vmatprep.subr.bf16.mxu0 0
  %2240 = vmatpush2.bf16.msra.mxu0 0
  %2241 = vmatprep.subr.bf16.mxu0 0
  %2242 = vmatpush2.bf16.msra.mxu0 0
  %2243 = vmatprep.subr.bf16.mxu0 0
  %2244 = vmatpush2.bf16.msra.mxu0 0
  %2245 = vmatprep.subr.bf16.mxu0 0
  %2246 = vmatpush2.bf16.msra.mxu0 0
  %2247 = vmatprep.subr.bf16.mxu0 0
  %2248 = vmatpush2.bf16.msra.mxu0 0
  %2249 = vmatprep.subr.bf16.mxu0 0
  %2250 = vmatpush2.bf16.msra.mxu0 0
  %2251 = vmatprep.subr.bf16.mxu0 0
  %2252 = vmatpush2.bf16.msra.mxu0 0
  %2253 = vmatprep.subr.bf16.mxu0 0
  %2254 = vmatpush2.bf16.msra.mxu0 0
  %2255 = vmatprep.mubr.bf16.mxu0 0
  %2256 = vmatmul.mubr.bf16.gmra.mxu0 %v2221
  %v2257 = vpop.f32.mrf.mxu0
  %v2258 = vadd.f32 %v2203, %v2257
  %v2259 = vpop.f32.mrf.mxu0
  %v2260 = vpop.f32.mrf.mxu0
  %v2261 = vadd.f32 %v2203, %v2260
  %v2262 = vpop.f32.mrf.mxu0
  %2263 = vdwg.mxu0
  %vm2264 = vcmask 80896
  %2265 = vst.msk [vmem:[%s9] sm:$0xff] %vm2264, %v2258
  %2266 = vst.msk [vmem:[%s9 + $0x8] sm:$0xff] %vm2264, %v2261
  // Predicated region
  $region38: #{my_lstm_forward.1} parent=0 // pred_check
    _
  $region39: #{my_lstm_forward.1} parent=0 // pred_check_branch
    %2268 = sbr.rel (0) target = $region41
  $region40: #{my_lstm_forward.1} parent=0 // pred_region
    _
  $region41: #{my_lstm_forward.1} parent=0 // pred_fallthru
    _
  // Predicated region
  $region42: #{my_lstm_forward.1} parent=0 // pred_check
    _
  $region43: #{my_lstm_forward.1} parent=0 // pred_check_branch
    %2270 = sbr.rel (0) target = $region45
  $region44: #{my_lstm_forward.1} parent=0 // pred_region
    _
  $region45: #{my_lstm_forward.1} parent=0 // pred_fallthru
    _

</llo_original>
